<compile_context>
chip_gen: v7x
topology: tpu7x:2x2x1
jax: 0.10.0
libtpu: 0.0.40
codegen_flags: <defaults>
</compile_context>

<pallas_src>
import functools

import jax
import jax.numpy as jnp
from jax.experimental import pallas as pl
from jax.experimental.pallas import tpu as pltpu


LANE = 128


def _round_up(x, m):
    return ((x + m - 1) // m) * m


def _pad_2d(a, rows, cols):
    r, c = a.shape
    if r == rows and c == cols:
        return a
    return jnp.pad(a, ((0, rows - r), (0, cols - c)))


def _mlp_kernel(x_ref, w1_ref, b1_ref, w2_ref, b2_ref, w3_ref, b3_ref, out_ref):
    # Fused 3-layer MLP on one (TM, D_in) activation tile; weights resident.
    x = x_ref[...]

    h1 = jnp.dot(x, w1_ref[...], preferred_element_type=jnp.float32) + b1_ref[...]
    h1 = jnp.maximum(h1, 0.0)                     # ReLU (activation_fn='relu')

    h2 = jnp.dot(h1, w2_ref[...], preferred_element_type=jnp.float32) + b2_ref[...]
    h2 = jnp.maximum(h2, 0.0)                     # ReLU

    out = jnp.dot(h2, w3_ref[...], preferred_element_type=jnp.float32) + b3_ref[...]
    out_ref[...] = out.astype(out_ref.dtype)


@jax.jit
def outgoing_noisy_mlp_forward(x, params):
    """x: (B, C, H, W) float32.  params: dict of unpadded weights/biases."""
    B = x.shape[0]
    x2d = x.reshape(B, -1).astype(jnp.float32)     # == x.view(x.size(0), -1)
    input_dim = x2d.shape[1]

    w1, b1 = params["w1"], params["b1"]
    w2, b2 = params["w2"], params["b2"]
    w3, b3 = params["w3"], params["b3"]
    h1_dim, h2_dim, n_cls = w1.shape[1], w2.shape[1], w3.shape[1]

    # Lane-dense padded sizes (zero padding + ReLU preserves the math exactly).
    d_in_p = _round_up(input_dim, LANE)
    h1_p = _round_up(h1_dim, LANE)                 # 300 -> 384
    h2_p = _round_up(h2_dim, LANE)                 # 100 -> 128
    n_p = _round_up(n_cls, LANE)                   # 10  -> 128

    w1p = _pad_2d(w1, d_in_p, h1_p)
    b1p = _pad_2d(b1.reshape(1, -1), 1, h1_p)
    w2p = _pad_2d(w2, h1_p, h2_p)
    b2p = _pad_2d(b2.reshape(1, -1), 1, h2_p)
    w3p = _pad_2d(w3, h2_p, n_p)
    b3p = _pad_2d(b3.reshape(1, -1), 1, n_p)

    # Batch tile: big enough to feed the MXU, small enough that
    # 2x double-buffered (TM, d_in_p) f32 x-tiles + 2x (TM, n_p) out-tiles
    # + ~1.9 MB resident weights fit the v5e 16 MiB scoped-VMEM default
    # (and v7x's 64 MiB physical / 32 MiB scoped per-core budget).
    TM = min(256, _round_up(B, 8))
    b_p = _round_up(B, TM)
    xp = _pad_2d(x2d, b_p, d_in_p)

    # NOTE: if accuracy budget allows, cast xp / w*p to bfloat16 here
    # (keep preferred_element_type=f32 in the kernel) for MXU-native throughput.

    grid = (b_p // TM,)

    def resident(i):                               # weights/biases pinned in VMEM
        return (0, 0)

    flops = 2 * b_p * (d_in_p * h1_p + h1_p * h2_p + h2_p * n_p)
    bytes_accessed = 4 * (
        b_p * d_in_p + b_p * n_p
        + d_in_p * h1_p + h1_p * h2_p + h2_p * n_p
        + h1_p + h2_p + n_p
    )

    out_padded = pl.pallas_call(
        _mlp_kernel,
        out_shape=jax.ShapeDtypeStruct((b_p, n_p), jnp.float32),
        grid=grid,
        in_specs=[
            pl.BlockSpec((TM, d_in_p), lambda i: (i, 0)),
            pl.BlockSpec((d_in_p, h1_p), resident),
            pl.BlockSpec((1, h1_p), resident),
            pl.BlockSpec((h1_p, h2_p), resident),
            pl.BlockSpec((1, h2_p), resident),
            pl.BlockSpec((h2_p, n_p), resident),
            pl.BlockSpec((1, n_p), resident),
        ],
        out_specs=pl.BlockSpec((TM, n_p), lambda i: (i, 0)),
        compiler_params=pltpu.CompilerParams(
            dimension_semantics=("parallel",),
        ),
        cost_estimate=pl.CostEstimate(
            flops=flops, transcendentals=0, bytes_accessed=bytes_accessed),
    )(xp, w1p, b1p, w2p, b2p, w3p, b3p)

    # Slice padded batch rows / padded class columns back off.
    return out_padded[:B, :n_cls]


def init_params(key, input_dim, n_cls, layer_dims=(300, 100)):
    """Deterministic PyTorch-Linear-style init (uniform +/- 1/sqrt(fan_in))."""
    params = {}
    dims = [input_dim] + list(layer_dims) + [n_cls]
    names = ["1", "2", "3"]
    for name, (din, dout) in zip(names, zip(dims[:-1], dims[1:])):
        key, kw, kb = jax.random.split(key, 3)
        bound = 1.0 / (din ** 0.5)
        params[f"w{name}"] = jax.random.uniform(
            kw, (din, dout), jnp.float32, minval=-bound, maxval=bound)
        params[f"b{name}"] = jax.random.uniform(
            kb, (1, dout), jnp.float32, minval=-bound, maxval=bound)
    return params


def _reference_forward(x, params):
    """Plain-JAX reference for sanity checking."""
    h = x.reshape(x.shape[0], -1)
    h = jnp.maximum(h @ params["w1"] + params["b1"], 0.0)
    h = jnp.maximum(h @ params["w2"] + params["b2"], 0.0)
    return h @ params["w3"] + params["b3"]


if __name__ == "__main__":
    key = jax.random.PRNGKey(0)
    k_x, k_p = jax.random.split(key)

    # Small shapes consistent with the module's forward: NCHW image flattened.
    B, C, H, W = 2, 4, 16, 16
    input_dim = C * H * W        # 1024
    n_cls = 10

    x = jax.random.normal(k_x, (B, C, H, W), jnp.float32)
    params = init_params(k_p, input_dim, n_cls, layer_dims=(300, 100))

    out = outgoing_noisy_mlp_forward(x, params)
    out = jax.block_until_ready(out)

    ref = _reference_forward(x, params)
    assert out.shape == (B, n_cls)
    assert jnp.allclose(out, ref, atol=1e-4, rtol=1e-4), "mismatch vs reference"

    print("KERNEL_OK")
</pallas_src>

<mosaic_0001>
module attributes {stable_mosaic.version = 11 : i64} {
  func.func @_mlp_kernel(%arg0: i32, %arg1: memref<8x1024xf32, #tpu.memory_space<vmem>>, %arg2: memref<1024x384xf32, #tpu.memory_space<vmem>>, %arg3: memref<1x384xf32, #tpu.memory_space<vmem>>, %arg4: memref<384x128xf32, #tpu.memory_space<vmem>>, %arg5: memref<1x128xf32, #tpu.memory_space<vmem>>, %arg6: memref<128x128xf32, #tpu.memory_space<vmem>>, %arg7: memref<1x128xf32, #tpu.memory_space<vmem>>, %arg8: memref<8x128xf32, #tpu.memory_space<vmem>>) attributes {dimension_semantics = [#tpu.dimension_semantics<parallel>], iteration_bounds = array<i64: 1>, scalar_prefetch = 0 : i64, scratch_operands = 0 : i64, tpu.core_type = #tpu.core_type<tc>, window_params = [{transform_indices = @transform_0, window_bounds = array<i64: 8, 1024>}, {pipeline_mode = #tpu.pipeline_mode<synchronous>, transform_indices = @transform_1, window_bounds = array<i64: 1024, 384>}, {pipeline_mode = #tpu.pipeline_mode<synchronous>, transform_indices = @transform_2, window_bounds = array<i64: 1, 384>}, {pipeline_mode = #tpu.pipeline_mode<synchronous>, transform_indices = @transform_3, window_bounds = array<i64: 384, 128>}, {pipeline_mode = #tpu.pipeline_mode<synchronous>, transform_indices = @transform_4, window_bounds = array<i64: 1, 128>}, {pipeline_mode = #tpu.pipeline_mode<synchronous>, transform_indices = @transform_5, window_bounds = array<i64: 128, 128>}, {pipeline_mode = #tpu.pipeline_mode<synchronous>, transform_indices = @transform_6, window_bounds = array<i64: 1, 128>}, {transform_indices = @transform_7, window_bounds = array<i64: 8, 128>}]} {
    %c0 = arith.constant 0 : index
    %c0_0 = arith.constant 0 : index
    %0 = vector.load %arg1[%c0, %c0_0] : memref<8x1024xf32, #tpu.memory_space<vmem>>, vector<8x1024xf32>
    %c0_1 = arith.constant 0 : index
    %c0_2 = arith.constant 0 : index
    %1 = vector.load %arg2[%c0_1, %c0_2] : memref<1024x384xf32, #tpu.memory_space<vmem>>, vector<1024x384xf32>
    %cst = arith.constant dense<0.000000e+00> : vector<8x384xf32>
    %2 = tpu.matmul %0, %1, %cst {dimension_numbers = #tpu.dot_dimension_numbers<[1], [0], [0], [1], [0, 0, 1, 1], [], []>} : vector<8x1024xf32>, vector<1024x384xf32>, vector<8x384xf32> -> vector<8x384xf32>
    %c0_3 = arith.constant 0 : index
    %c0_4 = arith.constant 0 : index
    %3 = vector.load %arg3[%c0_3, %c0_4] : memref<1x384xf32, #tpu.memory_space<vmem>>, vector<1x384xf32>
    %4 = vector.broadcast %3 : vector<1x384xf32> to vector<8x384xf32>
    %5 = arith.addf %2, %4 : vector<8x384xf32>
    %cst_5 = arith.constant 0.000000e+00 : f32
    %6 = vector.broadcast %cst_5 : f32 to vector<8x384xf32>
    %7 = arith.maximumf %5, %6 : vector<8x384xf32>
    %c0_6 = arith.constant 0 : index
    %c0_7 = arith.constant 0 : index
    %8 = vector.load %arg4[%c0_6, %c0_7] : memref<384x128xf32, #tpu.memory_space<vmem>>, vector<384x128xf32>
    %cst_8 = arith.constant dense<0.000000e+00> : vector<8x128xf32>
    %9 = tpu.matmul %7, %8, %cst_8 {dimension_numbers = #tpu.dot_dimension_numbers<[1], [0], [0], [1], [0, 0, 1, 1], [], []>} : vector<8x384xf32>, vector<384x128xf32>, vector<8x128xf32> -> vector<8x128xf32>
    %c0_9 = arith.constant 0 : index
    %c0_10 = arith.constant 0 : index
    %10 = vector.load %arg5[%c0_9, %c0_10] : memref<1x128xf32, #tpu.memory_space<vmem>>, vector<1x128xf32>
    %11 = vector.broadcast %10 : vector<1x128xf32> to vector<8x128xf32>
    %12 = arith.addf %9, %11 : vector<8x128xf32>
    %cst_11 = arith.constant 0.000000e+00 : f32
    %13 = vector.broadcast %cst_11 : f32 to vector<8x128xf32>
    %14 = arith.maximumf %12, %13 : vector<8x128xf32>
    %c0_12 = arith.constant 0 : index
    %c0_13 = arith.constant 0 : index
    %15 = vector.load %arg6[%c0_12, %c0_13] : memref<128x128xf32, #tpu.memory_space<vmem>>, vector<128x128xf32>
    %cst_14 = arith.constant dense<0.000000e+00> : vector<8x128xf32>
    %16 = tpu.matmul %14, %15, %cst_14 {dimension_numbers = #tpu.dot_dimension_numbers<[1], [0], [0], [1], [0, 0, 1, 1], [], []>} : vector<8x128xf32>, vector<128x128xf32>, vector<8x128xf32> -> vector<8x128xf32>
    %c0_15 = arith.constant 0 : index
    %c0_16 = arith.constant 0 : index
    %17 = vector.load %arg7[%c0_15, %c0_16] : memref<1x128xf32, #tpu.memory_space<vmem>>, vector<1x128xf32>
    %18 = vector.broadcast %17 : vector<1x128xf32> to vector<8x128xf32>
    %19 = arith.addf %16, %18 : vector<8x128xf32>
    %c0_17 = arith.constant 0 : index
    %c0_18 = arith.constant 0 : index
    %20 = vector.load %arg8[%c0_17, %c0_18] : memref<8x128xf32, #tpu.memory_space<vmem>>, vector<8x128xf32>
    tpu.vector_store %arg8[%c0_17, %c0_18], %19 {strides = array<i32>} : memref<8x128xf32, #tpu.memory_space<vmem>>, vector<8x128xf32>,
    return
  }
  func.func @transform_0(%arg0: i32) -> (i32, i32) {
    %c0_i32 = arith.constant 0 : i32
    %c0_i32_0 = arith.constant 0 : i32
    return %arg0, %c0_i32 : i32, i32
  }
  func.func @transform_1(%arg0: i32) -> (i32, i32) {
    %c0_i32 = arith.constant 0 : i32
    %c0_i32_0 = arith.constant 0 : i32
    %c0_i32_1 = arith.constant 0 : i32
    return %c0_i32, %c0_i32_0 : i32, i32
  }
  func.func @transform_2(%arg0: i32) -> (i32, i32) {
    %c0_i32 = arith.constant 0 : i32
    %c0_i32_0 = arith.constant 0 : i32
    %c0_i32_1 = arith.constant 0 : i32
    return %c0_i32, %c0_i32_0 : i32, i32
  }
  func.func @transform_3(%arg0: i32) -> (i32, i32) {
    %c0_i32 = arith.constant 0 : i32
    %c0_i32_0 = arith.constant 0 : i32
    %c0_i32_1 = arith.constant 0 : i32
    return %c0_i32, %c0_i32_0 : i32, i32
  }
  func.func @transform_4(%arg0: i32) -> (i32, i32) {
    %c0_i32 = arith.constant 0 : i32
    %c0_i32_0 = arith.constant 0 : i32
    %c0_i32_1 = arith.constant 0 : i32
    return %c0_i32, %c0_i32_0 : i32, i32
  }
  func.func @transform_5(%arg0: i32) -> (i32, i32) {
    %c0_i32 = arith.constant 0 : i32
    %c0_i32_0 = arith.constant 0 : i32
    %c0_i32_1 = arith.constant 0 : i32
    return %c0_i32, %c0_i32_0 : i32, i32
  }
  func.func @transform_6(%arg0: i32) -> (i32, i32) {
    %c0_i32 = arith.constant 0 : i32
    %c0_i32_0 = arith.constant 0 : i32
    %c0_i32_1 = arith.constant 0 : i32
    return %c0_i32, %c0_i32_0 : i32, i32
  }
  func.func @transform_7(%arg0: i32) -> (i32, i32) {
    %c0_i32 = arith.constant 0 : i32
    %c0_i32_0 = arith.constant 0 : i32
    return %arg0, %c0_i32 : i32, i32
  }
}

</mosaic_0001>

<llo_original>
// kernel: outgoing_noisy_mlp_forward.1
$region0: #{outgoing_noisy_mlp_forward.1}
  #allocation0 [shape = 'u32[]', space=smem, size = 0x4, offset = 0x4, fixed_abs, tag = 'smem constant byte address 0x4 - core index']
  #allocation1 [shape = 'u32[144,128]{1,0:T(1,128)}', space=vmem, size = 0x12000, scoped, tag = 'internal scratch']
  %s0 = inlined_call_operand.vmem [shape: f32[8,1024], index: 0, kind: input, shape index: {}]
  %s1 = inlined_call_operand.vmem [shape: f32[1024,384], index: 1, kind: input, shape index: {}]
  %s2 = inlined_call_operand.vmem [shape: f32[1,384], index: 2, kind: input, shape index: {}]
  %s3 = inlined_call_operand.vmem [shape: f32[384,128], index: 3, kind: input, shape index: {}]
  %s4 = inlined_call_operand.vmem [shape: f32[1,128], index: 4, kind: input, shape index: {}]
  %s5 = inlined_call_operand.vmem [shape: f32[128,128], index: 5, kind: input, shape index: {}]
  %s6 = inlined_call_operand.vmem [shape: f32[1,128], index: 6, kind: input, shape index: {}]
  %s7 = inlined_call_operand.vmem [shape: f32[8,128], index: 7, kind: output, shape index: {}]
  %s8 = sld [smem:[#allocation0]]
  $region38: #{outgoing_noisy_mlp_forward.1} parent=0
    _
  %s10 = ssub.s32 1, %s8
  %s11 = scalar_select 0, %s10, %s8
  // Predicated region
  $region2: #{outgoing_noisy_mlp_forward.1} parent=0 // pred_check
    _
  $region3: #{outgoing_noisy_mlp_forward.1} parent=0 // pred_check_branch
    %13 = sbr.rel (0) target = $region5
  $region4: #{outgoing_noisy_mlp_forward.1} parent=0 // pred_region
    _
  $region5: #{outgoing_noisy_mlp_forward.1} parent=0 // pred_fallthru
    _
  // Predicated region
  $region6: #{outgoing_noisy_mlp_forward.1} parent=0 // pred_check
    _
  $region7: #{outgoing_noisy_mlp_forward.1} parent=0 // pred_check_branch
    %15 = sbr.rel (0) target = $region9
  $region8: #{outgoing_noisy_mlp_forward.1} parent=0 // pred_region
    _
  $region9: #{outgoing_noisy_mlp_forward.1} parent=0 // pred_fallthru
    _
  // Predicated region
  $region10: #{outgoing_noisy_mlp_forward.1} parent=0 // pred_check
    _
  $region11: #{outgoing_noisy_mlp_forward.1} parent=0 // pred_check_branch
    %17 = sbr.rel (0) target = $region13
  $region12: #{outgoing_noisy_mlp_forward.1} parent=0 // pred_region
    _
  $region13: #{outgoing_noisy_mlp_forward.1} parent=0 // pred_fallthru
    _
  // Predicated region
  $region14: #{outgoing_noisy_mlp_forward.1} parent=0 // pred_check
    _
  $region15: #{outgoing_noisy_mlp_forward.1} parent=0 // pred_check_branch
    %19 = sbr.rel (0) target = $region17
  $region16: #{outgoing_noisy_mlp_forward.1} parent=0 // pred_region
    _
  $region17: #{outgoing_noisy_mlp_forward.1} parent=0 // pred_fallthru
    _
  // Predicated region
  $region18: #{outgoing_noisy_mlp_forward.1} parent=0 // pred_check
    _
  $region19: #{outgoing_noisy_mlp_forward.1} parent=0 // pred_check_branch
    %21 = sbr.rel (0) target = $region21
  $region20: #{outgoing_noisy_mlp_forward.1} parent=0 // pred_region
    _
  $region21: #{outgoing_noisy_mlp_forward.1} parent=0 // pred_fallthru
    _
  // Predicated region
  $region22: #{outgoing_noisy_mlp_forward.1} parent=0 // pred_check
    _
  $region23: #{outgoing_noisy_mlp_forward.1} parent=0 // pred_check_branch
    %23 = sbr.rel (0) target = $region25
  $region24: #{outgoing_noisy_mlp_forward.1} parent=0 // pred_region
    _
  $region25: #{outgoing_noisy_mlp_forward.1} parent=0 // pred_fallthru
    _
  // Predicated region
  $region26: #{outgoing_noisy_mlp_forward.1} parent=0 // pred_check
    _
  $region27: #{outgoing_noisy_mlp_forward.1} parent=0 // pred_check_branch
    %25 = sbr.rel (0) target = $region29
  $region28: #{outgoing_noisy_mlp_forward.1} parent=0 // pred_region
    _
  $region29: #{outgoing_noisy_mlp_forward.1} parent=0 // pred_fallthru
    _
  %v26 = vld [vmem:[%s0] sm:$0xff]
  %v27 = vld [vmem:[%s0 + $0x8] sm:$0xff]
  %v28 = vld [vmem:[%s0 + $0x10] sm:$0xff]
  %v29 = vld [vmem:[%s0 + $0x18] sm:$0xff]
  %v30 = vld [vmem:[%s0 + $0x20] sm:$0xff]
  %v31 = vld [vmem:[%s0 + $0x28] sm:$0xff]
  %v32 = vld [vmem:[%s0 + $0x30] sm:$0xff]
  %v33 = vld [vmem:[%s0 + $0x38] sm:$0xff]
  %v34 = vld [vmem:[%s1] sm:$0xff]
  %v35 = vld [vmem:[%s1 + $0x8] sm:$0xff]
  %v36 = vld [vmem:[%s1 + $0x10] sm:$0xff]
  %v37 = vld [vmem:[%s1 + $0x18] sm:$0xff]
  %v38 = vld [vmem:[%s1 + $0x20] sm:$0xff]
  %v39 = vld [vmem:[%s1 + $0x28] sm:$0xff]
  %v40 = vld [vmem:[%s1 + $0x30] sm:$0xff]
  %v41 = vld [vmem:[%s1 + $0x38] sm:$0xff]
  %v42 = vld [vmem:[%s1 + $0x40] sm:$0xff]
  %v43 = vld [vmem:[%s1 + $0x48] sm:$0xff]
  %v44 = vld [vmem:[%s1 + $0x50] sm:$0xff]
  %v45 = vld [vmem:[%s1 + $0x58] sm:$0xff]
  %v46 = vld [vmem:[%s1 + $0x60] sm:$0xff]
  %v47 = vld [vmem:[%s1 + $0x68] sm:$0xff]
  %v48 = vld [vmem:[%s1 + $0x70] sm:$0xff]
  %v49 = vld [vmem:[%s1 + $0x78] sm:$0xff]
  %v50 = vld [vmem:[%s1 + $0x80] sm:$0xff]
  %v51 = vld [vmem:[%s1 + $0x88] sm:$0xff]
  %v52 = vld [vmem:[%s1 + $0x90] sm:$0xff]
  %v53 = vld [vmem:[%s1 + $0x98] sm:$0xff]
  %v54 = vld [vmem:[%s1 + $0xa0] sm:$0xff]
  %v55 = vld [vmem:[%s1 + $0xa8] sm:$0xff]
  %v56 = vld [vmem:[%s1 + $0xb0] sm:$0xff]
  %v57 = vld [vmem:[%s1 + $0xb8] sm:$0xff]
  %v58 = vld [vmem:[%s1 + $0xc0] sm:$0xff]
  %v59 = vld [vmem:[%s1 + $0xc8] sm:$0xff]
  %v60 = vld [vmem:[%s1 + $0xd0] sm:$0xff]
  %v61 = vld [vmem:[%s1 + $0xd8] sm:$0xff]
  %v62 = vld [vmem:[%s1 + $0xe0] sm:$0xff]
  %v63 = vld [vmem:[%s1 + $0xe8] sm:$0xff]
  %v64 = vld [vmem:[%s1 + $0xf0] sm:$0xff]
  %v65 = vld [vmem:[%s1 + $0xf8] sm:$0xff]
  %v66 = vld [vmem:[%s1 + $0x100] sm:$0xff]
  %v67 = vld [vmem:[%s1 + $0x108] sm:$0xff]
  %v68 = vld [vmem:[%s1 + $0x110] sm:$0xff]
  %v69 = vld [vmem:[%s1 + $0x118] sm:$0xff]
  %v70 = vld [vmem:[%s1 + $0x120] sm:$0xff]
  %v71 = vld [vmem:[%s1 + $0x128] sm:$0xff]
  %v72 = vld [vmem:[%s1 + $0x130] sm:$0xff]
  %v73 = vld [vmem:[%s1 + $0x138] sm:$0xff]
  %v74 = vld [vmem:[%s1 + $0x140] sm:$0xff]
  %v75 = vld [vmem:[%s1 + $0x148] sm:$0xff]
  %v76 = vld [vmem:[%s1 + $0x150] sm:$0xff]
  %v77 = vld [vmem:[%s1 + $0x158] sm:$0xff]
  %v78 = vld [vmem:[%s1 + $0x160] sm:$0xff]
  %v79 = vld [vmem:[%s1 + $0x168] sm:$0xff]
  %v80 = vld [vmem:[%s1 + $0x170] sm:$0xff]
  %v81 = vld [vmem:[%s1 + $0x178] sm:$0xff]
  %v82 = vld [vmem:[%s1 + $0x180] sm:$0xff]
  %v83 = vld [vmem:[%s1 + $0x188] sm:$0xff]
  %v84 = vld [vmem:[%s1 + $0x190] sm:$0xff]
  %v85 = vld [vmem:[%s1 + $0x198] sm:$0xff]
  %v86 = vld [vmem:[%s1 + $0x1a0] sm:$0xff]
  %v87 = vld [vmem:[%s1 + $0x1a8] sm:$0xff]
  %v88 = vld [vmem:[%s1 + $0x1b0] sm:$0xff]
  %v89 = vld [vmem:[%s1 + $0x1b8] sm:$0xff]
  %v90 = vld [vmem:[%s1 + $0x1c0] sm:$0xff]
  %v91 = vld [vmem:[%s1 + $0x1c8] sm:$0xff]
  %v92 = vld [vmem:[%s1 + $0x1d0] sm:$0xff]
  %v93 = vld [vmem:[%s1 + $0x1d8] sm:$0xff]
  %v94 = vld [vmem:[%s1 + $0x1e0] sm:$0xff]
  %v95 = vld [vmem:[%s1 + $0x1e8] sm:$0xff]
  %v96 = vld [vmem:[%s1 + $0x1f0] sm:$0xff]
  %v97 = vld [vmem:[%s1 + $0x1f8] sm:$0xff]
  %v98 = vld [vmem:[%s1 + $0x200] sm:$0xff]
  %v99 = vld [vmem:[%s1 + $0x208] sm:$0xff]
  %v100 = vld [vmem:[%s1 + $0x210] sm:$0xff]
  %v101 = vld [vmem:[%s1 + $0x218] sm:$0xff]
  %v102 = vld [vmem:[%s1 + $0x220] sm:$0xff]
  %v103 = vld [vmem:[%s1 + $0x228] sm:$0xff]
  %v104 = vld [vmem:[%s1 + $0x230] sm:$0xff]
  %v105 = vld [vmem:[%s1 + $0x238] sm:$0xff]
  %v106 = vld [vmem:[%s1 + $0x240] sm:$0xff]
  %v107 = vld [vmem:[%s1 + $0x248] sm:$0xff]
  %v108 = vld [vmem:[%s1 + $0x250] sm:$0xff]
  %v109 = vld [vmem:[%s1 + $0x258] sm:$0xff]
  %v110 = vld [vmem:[%s1 + $0x260] sm:$0xff]
  %v111 = vld [vmem:[%s1 + $0x268] sm:$0xff]
  %v112 = vld [vmem:[%s1 + $0x270] sm:$0xff]
  %v113 = vld [vmem:[%s1 + $0x278] sm:$0xff]
  %v114 = vld [vmem:[%s1 + $0x280] sm:$0xff]
  %v115 = vld [vmem:[%s1 + $0x288] sm:$0xff]
  %v116 = vld [vmem:[%s1 + $0x290] sm:$0xff]
  %v117 = vld [vmem:[%s1 + $0x298] sm:$0xff]
  %v118 = vld [vmem:[%s1 + $0x2a0] sm:$0xff]
  %v119 = vld [vmem:[%s1 + $0x2a8] sm:$0xff]
  %v120 = vld [vmem:[%s1 + $0x2b0] sm:$0xff]
  %v121 = vld [vmem:[%s1 + $0x2b8] sm:$0xff]
  %v122 = vld [vmem:[%s1 + $0x2c0] sm:$0xff]
  %v123 = vld [vmem:[%s1 + $0x2c8] sm:$0xff]
  %v124 = vld [vmem:[%s1 + $0x2d0] sm:$0xff]
  %v125 = vld [vmem:[%s1 + $0x2d8] sm:$0xff]
  %v126 = vld [vmem:[%s1 + $0x2e0] sm:$0xff]
  %v127 = vld [vmem:[%s1 + $0x2e8] sm:$0xff]
  %v128 = vld [vmem:[%s1 + $0x2f0] sm:$0xff]
  %v129 = vld [vmem:[%s1 + $0x2f8] sm:$0xff]
  %v130 = vld [vmem:[%s1 + $0x300] sm:$0xff]
  %v131 = vld [vmem:[%s1 + $0x308] sm:$0xff]
  %v132 = vld [vmem:[%s1 + $0x310] sm:$0xff]
  %v133 = vld [vmem:[%s1 + $0x318] sm:$0xff]
  %v134 = vld [vmem:[%s1 + $0x320] sm:$0xff]
  %v135 = vld [vmem:[%s1 + $0x328] sm:$0xff]
  %v136 = vld [vmem:[%s1 + $0x330] sm:$0xff]
  %v137 = vld [vmem:[%s1 + $0x338] sm:$0xff]
  %v138 = vld [vmem:[%s1 + $0x340] sm:$0xff]
  %v139 = vld [vmem:[%s1 + $0x348] sm:$0xff]
  %v140 = vld [vmem:[%s1 + $0x350] sm:$0xff]
  %v141 = vld [vmem:[%s1 + $0x358] sm:$0xff]
  %v142 = vld [vmem:[%s1 + $0x360] sm:$0xff]
  %v143 = vld [vmem:[%s1 + $0x368] sm:$0xff]
  %v144 = vld [vmem:[%s1 + $0x370] sm:$0xff]
  %v145 = vld [vmem:[%s1 + $0x378] sm:$0xff]
  %v146 = vld [vmem:[%s1 + $0x380] sm:$0xff]
  %v147 = vld [vmem:[%s1 + $0x388] sm:$0xff]
  %v148 = vld [vmem:[%s1 + $0x390] sm:$0xff]
  %v149 = vld [vmem:[%s1 + $0x398] sm:$0xff]
  %v150 = vld [vmem:[%s1 + $0x3a0] sm:$0xff]
  %v151 = vld [vmem:[%s1 + $0x3a8] sm:$0xff]
  %v152 = vld [vmem:[%s1 + $0x3b0] sm:$0xff]
  %v153 = vld [vmem:[%s1 + $0x3b8] sm:$0xff]
  %v154 = vld [vmem:[%s1 + $0x3c0] sm:$0xff]
  %v155 = vld [vmem:[%s1 + $0x3c8] sm:$0xff]
  %v156 = vld [vmem:[%s1 + $0x3d0] sm:$0xff]
  %v157 = vld [vmem:[%s1 + $0x3d8] sm:$0xff]
  %v158 = vld [vmem:[%s1 + $0x3e0] sm:$0xff]
  %v159 = vld [vmem:[%s1 + $0x3e8] sm:$0xff]
  %v160 = vld [vmem:[%s1 + $0x3f0] sm:$0xff]
  %v161 = vld [vmem:[%s1 + $0x3f8] sm:$0xff]
  %v162 = vld [vmem:[%s1 + $0x400] sm:$0xff]
  %v163 = vld [vmem:[%s1 + $0x408] sm:$0xff]
  %v164 = vld [vmem:[%s1 + $0x410] sm:$0xff]
  %v165 = vld [vmem:[%s1 + $0x418] sm:$0xff]
  %v166 = vld [vmem:[%s1 + $0x420] sm:$0xff]
  %v167 = vld [vmem:[%s1 + $0x428] sm:$0xff]
  %v168 = vld [vmem:[%s1 + $0x430] sm:$0xff]
  %v169 = vld [vmem:[%s1 + $0x438] sm:$0xff]
  %v170 = vld [vmem:[%s1 + $0x440] sm:$0xff]
  %v171 = vld [vmem:[%s1 + $0x448] sm:$0xff]
  %v172 = vld [vmem:[%s1 + $0x450] sm:$0xff]
  %v173 = vld [vmem:[%s1 + $0x458] sm:$0xff]
  %v174 = vld [vmem:[%s1 + $0x460] sm:$0xff]
  %v175 = vld [vmem:[%s1 + $0x468] sm:$0xff]
  %v176 = vld [vmem:[%s1 + $0x470] sm:$0xff]
  %v177 = vld [vmem:[%s1 + $0x478] sm:$0xff]
  %v178 = vld [vmem:[%s1 + $0x480] sm:$0xff]
  %v179 = vld [vmem:[%s1 + $0x488] sm:$0xff]
  %v180 = vld [vmem:[%s1 + $0x490] sm:$0xff]
  %v181 = vld [vmem:[%s1 + $0x498] sm:$0xff]
  %v182 = vld [vmem:[%s1 + $0x4a0] sm:$0xff]
  %v183 = vld [vmem:[%s1 + $0x4a8] sm:$0xff]
  %v184 = vld [vmem:[%s1 + $0x4b0] sm:$0xff]
  %v185 = vld [vmem:[%s1 + $0x4b8] sm:$0xff]
  %v186 = vld [vmem:[%s1 + $0x4c0] sm:$0xff]
  %v187 = vld [vmem:[%s1 + $0x4c8] sm:$0xff]
  %v188 = vld [vmem:[%s1 + $0x4d0] sm:$0xff]
  %v189 = vld [vmem:[%s1 + $0x4d8] sm:$0xff]
  %v190 = vld [vmem:[%s1 + $0x4e0] sm:$0xff]
  %v191 = vld [vmem:[%s1 + $0x4e8] sm:$0xff]
  %v192 = vld [vmem:[%s1 + $0x4f0] sm:$0xff]
  %v193 = vld [vmem:[%s1 + $0x4f8] sm:$0xff]
  %v194 = vld [vmem:[%s1 + $0x500] sm:$0xff]
  %v195 = vld [vmem:[%s1 + $0x508] sm:$0xff]
  %v196 = vld [vmem:[%s1 + $0x510] sm:$0xff]
  %v197 = vld [vmem:[%s1 + $0x518] sm:$0xff]
  %v198 = vld [vmem:[%s1 + $0x520] sm:$0xff]
  %v199 = vld [vmem:[%s1 + $0x528] sm:$0xff]
  %v200 = vld [vmem:[%s1 + $0x530] sm:$0xff]
  %v201 = vld [vmem:[%s1 + $0x538] sm:$0xff]
  %v202 = vld [vmem:[%s1 + $0x540] sm:$0xff]
  %v203 = vld [vmem:[%s1 + $0x548] sm:$0xff]
  %v204 = vld [vmem:[%s1 + $0x550] sm:$0xff]
  %v205 = vld [vmem:[%s1 + $0x558] sm:$0xff]
  %v206 = vld [vmem:[%s1 + $0x560] sm:$0xff]
  %v207 = vld [vmem:[%s1 + $0x568] sm:$0xff]
  %v208 = vld [vmem:[%s1 + $0x570] sm:$0xff]
  %v209 = vld [vmem:[%s1 + $0x578] sm:$0xff]
  %v210 = vld [vmem:[%s1 + $0x580] sm:$0xff]
  %v211 = vld [vmem:[%s1 + $0x588] sm:$0xff]
  %v212 = vld [vmem:[%s1 + $0x590] sm:$0xff]
  %v213 = vld [vmem:[%s1 + $0x598] sm:$0xff]
  %v214 = vld [vmem:[%s1 + $0x5a0] sm:$0xff]
  %v215 = vld [vmem:[%s1 + $0x5a8] sm:$0xff]
  %v216 = vld [vmem:[%s1 + $0x5b0] sm:$0xff]
  %v217 = vld [vmem:[%s1 + $0x5b8] sm:$0xff]
  %v218 = vld [vmem:[%s1 + $0x5c0] sm:$0xff]
  %v219 = vld [vmem:[%s1 + $0x5c8] sm:$0xff]
  %v220 = vld [vmem:[%s1 + $0x5d0] sm:$0xff]
  %v221 = vld [vmem:[%s1 + $0x5d8] sm:$0xff]
  %v222 = vld [vmem:[%s1 + $0x5e0] sm:$0xff]
  %v223 = vld [vmem:[%s1 + $0x5e8] sm:$0xff]
  %v224 = vld [vmem:[%s1 + $0x5f0] sm:$0xff]
  %v225 = vld [vmem:[%s1 + $0x5f8] sm:$0xff]
  %v226 = vld [vmem:[%s1 + $0x600] sm:$0xff]
  %v227 = vld [vmem:[%s1 + $0x608] sm:$0xff]
  %v228 = vld [vmem:[%s1 + $0x610] sm:$0xff]
  %v229 = vld [vmem:[%s1 + $0x618] sm:$0xff]
  %v230 = vld [vmem:[%s1 + $0x620] sm:$0xff]
  %v231 = vld [vmem:[%s1 + $0x628] sm:$0xff]
  %v232 = vld [vmem:[%s1 + $0x630] sm:$0xff]
  %v233 = vld [vmem:[%s1 + $0x638] sm:$0xff]
  %v234 = vld [vmem:[%s1 + $0x640] sm:$0xff]
  %v235 = vld [vmem:[%s1 + $0x648] sm:$0xff]
  %v236 = vld [vmem:[%s1 + $0x650] sm:$0xff]
  %v237 = vld [vmem:[%s1 + $0x658] sm:$0xff]
  %v238 = vld [vmem:[%s1 + $0x660] sm:$0xff]
  %v239 = vld [vmem:[%s1 + $0x668] sm:$0xff]
  %v240 = vld [vmem:[%s1 + $0x670] sm:$0xff]
  %v241 = vld [vmem:[%s1 + $0x678] sm:$0xff]
  %v242 = vld [vmem:[%s1 + $0x680] sm:$0xff]
  %v243 = vld [vmem:[%s1 + $0x688] sm:$0xff]
  %v244 = vld [vmem:[%s1 + $0x690] sm:$0xff]
  %v245 = vld [vmem:[%s1 + $0x698] sm:$0xff]
  %v246 = vld [vmem:[%s1 + $0x6a0] sm:$0xff]
  %v247 = vld [vmem:[%s1 + $0x6a8] sm:$0xff]
  %v248 = vld [vmem:[%s1 + $0x6b0] sm:$0xff]
  %v249 = vld [vmem:[%s1 + $0x6b8] sm:$0xff]
  %v250 = vld [vmem:[%s1 + $0x6c0] sm:$0xff]
  %v251 = vld [vmem:[%s1 + $0x6c8] sm:$0xff]
  %v252 = vld [vmem:[%s1 + $0x6d0] sm:$0xff]
  %v253 = vld [vmem:[%s1 + $0x6d8] sm:$0xff]
  %v254 = vld [vmem:[%s1 + $0x6e0] sm:$0xff]
  %v255 = vld [vmem:[%s1 + $0x6e8] sm:$0xff]
  %v256 = vld [vmem:[%s1 + $0x6f0] sm:$0xff]
  %v257 = vld [vmem:[%s1 + $0x6f8] sm:$0xff]
  %v258 = vld [vmem:[%s1 + $0x700] sm:$0xff]
  %v259 = vld [vmem:[%s1 + $0x708] sm:$0xff]
  %v260 = vld [vmem:[%s1 + $0x710] sm:$0xff]
  %v261 = vld [vmem:[%s1 + $0x718] sm:$0xff]
  %v262 = vld [vmem:[%s1 + $0x720] sm:$0xff]
  %v263 = vld [vmem:[%s1 + $0x728] sm:$0xff]
  %v264 = vld [vmem:[%s1 + $0x730] sm:$0xff]
  %v265 = vld [vmem:[%s1 + $0x738] sm:$0xff]
  %v266 = vld [vmem:[%s1 + $0x740] sm:$0xff]
  %v267 = vld [vmem:[%s1 + $0x748] sm:$0xff]
  %v268 = vld [vmem:[%s1 + $0x750] sm:$0xff]
  %v269 = vld [vmem:[%s1 + $0x758] sm:$0xff]
  %v270 = vld [vmem:[%s1 + $0x760] sm:$0xff]
  %v271 = vld [vmem:[%s1 + $0x768] sm:$0xff]
  %v272 = vld [vmem:[%s1 + $0x770] sm:$0xff]
  %v273 = vld [vmem:[%s1 + $0x778] sm:$0xff]
  %v274 = vld [vmem:[%s1 + $0x780] sm:$0xff]
  %v275 = vld [vmem:[%s1 + $0x788] sm:$0xff]
  %v276 = vld [vmem:[%s1 + $0x790] sm:$0xff]
  %v277 = vld [vmem:[%s1 + $0x798] sm:$0xff]
  %v278 = vld [vmem:[%s1 + $0x7a0] sm:$0xff]
  %v279 = vld [vmem:[%s1 + $0x7a8] sm:$0xff]
  %v280 = vld [vmem:[%s1 + $0x7b0] sm:$0xff]
  %v281 = vld [vmem:[%s1 + $0x7b8] sm:$0xff]
  %v282 = vld [vmem:[%s1 + $0x7c0] sm:$0xff]
  %v283 = vld [vmem:[%s1 + $0x7c8] sm:$0xff]
  %v284 = vld [vmem:[%s1 + $0x7d0] sm:$0xff]
  %v285 = vld [vmem:[%s1 + $0x7d8] sm:$0xff]
  %v286 = vld [vmem:[%s1 + $0x7e0] sm:$0xff]
  %v287 = vld [vmem:[%s1 + $0x7e8] sm:$0xff]
  %v288 = vld [vmem:[%s1 + $0x7f0] sm:$0xff]
  %v289 = vld [vmem:[%s1 + $0x7f8] sm:$0xff]
  %v290 = vld [vmem:[%s1 + $0x800] sm:$0xff]
  %v291 = vld [vmem:[%s1 + $0x808] sm:$0xff]
  %v292 = vld [vmem:[%s1 + $0x810] sm:$0xff]
  %v293 = vld [vmem:[%s1 + $0x818] sm:$0xff]
  %v294 = vld [vmem:[%s1 + $0x820] sm:$0xff]
  %v295 = vld [vmem:[%s1 + $0x828] sm:$0xff]
  %v296 = vld [vmem:[%s1 + $0x830] sm:$0xff]
  %v297 = vld [vmem:[%s1 + $0x838] sm:$0xff]
  %v298 = vld [vmem:[%s1 + $0x840] sm:$0xff]
  %v299 = vld [vmem:[%s1 + $0x848] sm:$0xff]
  %v300 = vld [vmem:[%s1 + $0x850] sm:$0xff]
  %v301 = vld [vmem:[%s1 + $0x858] sm:$0xff]
  %v302 = vld [vmem:[%s1 + $0x860] sm:$0xff]
  %v303 = vld [vmem:[%s1 + $0x868] sm:$0xff]
  %v304 = vld [vmem:[%s1 + $0x870] sm:$0xff]
  %v305 = vld [vmem:[%s1 + $0x878] sm:$0xff]
  %v306 = vld [vmem:[%s1 + $0x880] sm:$0xff]
  %v307 = vld [vmem:[%s1 + $0x888] sm:$0xff]
  %v308 = vld [vmem:[%s1 + $0x890] sm:$0xff]
  %v309 = vld [vmem:[%s1 + $0x898] sm:$0xff]
  %v310 = vld [vmem:[%s1 + $0x8a0] sm:$0xff]
  %v311 = vld [vmem:[%s1 + $0x8a8] sm:$0xff]
  %v312 = vld [vmem:[%s1 + $0x8b0] sm:$0xff]
  %v313 = vld [vmem:[%s1 + $0x8b8] sm:$0xff]
  %v314 = vld [vmem:[%s1 + $0x8c0] sm:$0xff]
  %v315 = vld [vmem:[%s1 + $0x8c8] sm:$0xff]
  %v316 = vld [vmem:[%s1 + $0x8d0] sm:$0xff]
  %v317 = vld [vmem:[%s1 + $0x8d8] sm:$0xff]
  %v318 = vld [vmem:[%s1 + $0x8e0] sm:$0xff]
  %v319 = vld [vmem:[%s1 + $0x8e8] sm:$0xff]
  %v320 = vld [vmem:[%s1 + $0x8f0] sm:$0xff]
  %v321 = vld [vmem:[%s1 + $0x8f8] sm:$0xff]
  %v322 = vld [vmem:[%s1 + $0x900] sm:$0xff]
  %v323 = vld [vmem:[%s1 + $0x908] sm:$0xff]
  %v324 = vld [vmem:[%s1 + $0x910] sm:$0xff]
  %v325 = vld [vmem:[%s1 + $0x918] sm:$0xff]
  %v326 = vld [vmem:[%s1 + $0x920] sm:$0xff]
  %v327 = vld [vmem:[%s1 + $0x928] sm:$0xff]
  %v328 = vld [vmem:[%s1 + $0x930] sm:$0xff]
  %v329 = vld [vmem:[%s1 + $0x938] sm:$0xff]
  %v330 = vld [vmem:[%s1 + $0x940] sm:$0xff]
  %v331 = vld [vmem:[%s1 + $0x948] sm:$0xff]
  %v332 = vld [vmem:[%s1 + $0x950] sm:$0xff]
  %v333 = vld [vmem:[%s1 + $0x958] sm:$0xff]
  %v334 = vld [vmem:[%s1 + $0x960] sm:$0xff]
  %v335 = vld [vmem:[%s1 + $0x968] sm:$0xff]
  %v336 = vld [vmem:[%s1 + $0x970] sm:$0xff]
  %v337 = vld [vmem:[%s1 + $0x978] sm:$0xff]
  %v338 = vld [vmem:[%s1 + $0x980] sm:$0xff]
  %v339 = vld [vmem:[%s1 + $0x988] sm:$0xff]
  %v340 = vld [vmem:[%s1 + $0x990] sm:$0xff]
  %v341 = vld [vmem:[%s1 + $0x998] sm:$0xff]
  %v342 = vld [vmem:[%s1 + $0x9a0] sm:$0xff]
  %v343 = vld [vmem:[%s1 + $0x9a8] sm:$0xff]
  %v344 = vld [vmem:[%s1 + $0x9b0] sm:$0xff]
  %v345 = vld [vmem:[%s1 + $0x9b8] sm:$0xff]
  %v346 = vld [vmem:[%s1 + $0x9c0] sm:$0xff]
  %v347 = vld [vmem:[%s1 + $0x9c8] sm:$0xff]
  %v348 = vld [vmem:[%s1 + $0x9d0] sm:$0xff]
  %v349 = vld [vmem:[%s1 + $0x9d8] sm:$0xff]
  %v350 = vld [vmem:[%s1 + $0x9e0] sm:$0xff]
  %v351 = vld [vmem:[%s1 + $0x9e8] sm:$0xff]
  %v352 = vld [vmem:[%s1 + $0x9f0] sm:$0xff]
  %v353 = vld [vmem:[%s1 + $0x9f8] sm:$0xff]
  %v354 = vld [vmem:[%s1 + $0xa00] sm:$0xff]
  %v355 = vld [vmem:[%s1 + $0xa08] sm:$0xff]
  %v356 = vld [vmem:[%s1 + $0xa10] sm:$0xff]
  %v357 = vld [vmem:[%s1 + $0xa18] sm:$0xff]
  %v358 = vld [vmem:[%s1 + $0xa20] sm:$0xff]
  %v359 = vld [vmem:[%s1 + $0xa28] sm:$0xff]
  %v360 = vld [vmem:[%s1 + $0xa30] sm:$0xff]
  %v361 = vld [vmem:[%s1 + $0xa38] sm:$0xff]
  %v362 = vld [vmem:[%s1 + $0xa40] sm:$0xff]
  %v363 = vld [vmem:[%s1 + $0xa48] sm:$0xff]
  %v364 = vld [vmem:[%s1 + $0xa50] sm:$0xff]
  %v365 = vld [vmem:[%s1 + $0xa58] sm:$0xff]
  %v366 = vld [vmem:[%s1 + $0xa60] sm:$0xff]
  %v367 = vld [vmem:[%s1 + $0xa68] sm:$0xff]
  %v368 = vld [vmem:[%s1 + $0xa70] sm:$0xff]
  %v369 = vld [vmem:[%s1 + $0xa78] sm:$0xff]
  %v370 = vld [vmem:[%s1 + $0xa80] sm:$0xff]
  %v371 = vld [vmem:[%s1 + $0xa88] sm:$0xff]
  %v372 = vld [vmem:[%s1 + $0xa90] sm:$0xff]
  %v373 = vld [vmem:[%s1 + $0xa98] sm:$0xff]
  %v374 = vld [vmem:[%s1 + $0xaa0] sm:$0xff]
  %v375 = vld [vmem:[%s1 + $0xaa8] sm:$0xff]
  %v376 = vld [vmem:[%s1 + $0xab0] sm:$0xff]
  %v377 = vld [vmem:[%s1 + $0xab8] sm:$0xff]
  %v378 = vld [vmem:[%s1 + $0xac0] sm:$0xff]
  %v379 = vld [vmem:[%s1 + $0xac8] sm:$0xff]
  %v380 = vld [vmem:[%s1 + $0xad0] sm:$0xff]
  %v381 = vld [vmem:[%s1 + $0xad8] sm:$0xff]
  %v382 = vld [vmem:[%s1 + $0xae0] sm:$0xff]
  %v383 = vld [vmem:[%s1 + $0xae8] sm:$0xff]
  %v384 = vld [vmem:[%s1 + $0xaf0] sm:$0xff]
  %v385 = vld [vmem:[%s1 + $0xaf8] sm:$0xff]
  %v386 = vld [vmem:[%s1 + $0xb00] sm:$0xff]
  %v387 = vld [vmem:[%s1 + $0xb08] sm:$0xff]
  %v388 = vld [vmem:[%s1 + $0xb10] sm:$0xff]
  %v389 = vld [vmem:[%s1 + $0xb18] sm:$0xff]
  %v390 = vld [vmem:[%s1 + $0xb20] sm:$0xff]
  %v391 = vld [vmem:[%s1 + $0xb28] sm:$0xff]
  %v392 = vld [vmem:[%s1 + $0xb30] sm:$0xff]
  %v393 = vld [vmem:[%s1 + $0xb38] sm:$0xff]
  %v394 = vld [vmem:[%s1 + $0xb40] sm:$0xff]
  %v395 = vld [vmem:[%s1 + $0xb48] sm:$0xff]
  %v396 = vld [vmem:[%s1 + $0xb50] sm:$0xff]
  %v397 = vld [vmem:[%s1 + $0xb58] sm:$0xff]
  %v398 = vld [vmem:[%s1 + $0xb60] sm:$0xff]
  %v399 = vld [vmem:[%s1 + $0xb68] sm:$0xff]
  %v400 = vld [vmem:[%s1 + $0xb70] sm:$0xff]
  %v401 = vld [vmem:[%s1 + $0xb78] sm:$0xff]
  %v402 = vld [vmem:[%s1 + $0xb80] sm:$0xff]
  %v403 = vld [vmem:[%s1 + $0xb88] sm:$0xff]
  %v404 = vld [vmem:[%s1 + $0xb90] sm:$0xff]
  %v405 = vld [vmem:[%s1 + $0xb98] sm:$0xff]
  %v406 = vld [vmem:[%s1 + $0xba0] sm:$0xff]
  %v407 = vld [vmem:[%s1 + $0xba8] sm:$0xff]
  %v408 = vld [vmem:[%s1 + $0xbb0] sm:$0xff]
  %v409 = vld [vmem:[%s1 + $0xbb8] sm:$0xff]
  %v410 = vld [vmem:[%s1 + $0xbc0] sm:$0xff]
  %v411 = vld [vmem:[%s1 + $0xbc8] sm:$0xff]
  %v412 = vld [vmem:[%s1 + $0xbd0] sm:$0xff]
  %v413 = vld [vmem:[%s1 + $0xbd8] sm:$0xff]
  %v414 = vld [vmem:[%s1 + $0xbe0] sm:$0xff]
  %v415 = vld [vmem:[%s1 + $0xbe8] sm:$0xff]
  %v416 = vld [vmem:[%s1 + $0xbf0] sm:$0xff]
  %v417 = vld [vmem:[%s1 + $0xbf8] sm:$0xff]
  %v418 = vld [vmem:[%s2] sm:$0x7]
  %v420 = vlaneseq
  %v421 = vshrl.u32 %v420, 7
  %v422 = vsub.s32 0, %v421
  %v423 = vrot.slane %v418, %v422
  %v424 = vlaneseq
  %v425 = vshrl.u32 %v424, 7
  %v426 = vsub.s32 1, %v425
  %v427 = vrot.slane %v418, %v426
  %v428 = vlaneseq
  %v429 = vshrl.u32 %v428, 7
  %v430 = vsub.s32 2, %v429
  %v431 = vrot.slane %v418, %v430
  %435 = vmatprep.subr.mxu0 %v35
  %436 = vmatpush1.msra.mxu0 %v34
  %437 = vmatprep.subr.mxu0 %v38
  %438 = vmatpush1.msra.mxu0 %v37
  %439 = vmatprep.subr.mxu0 %v41
  %440 = vmatpush1.msra.mxu0 %v40
  %441 = vmatprep.subr.mxu0 %v44
  %442 = vmatpush1.msra.mxu0 %v43
  %443 = vmatprep.subr.mxu0 %v47
  %444 = vmatpush1.msra.mxu0 %v46
  %445 = vmatprep.subr.mxu0 %v50
  %446 = vmatpush1.msra.mxu0 %v49
  %447 = vmatprep.subr.mxu0 %v53
  %448 = vmatpush1.msra.mxu0 %v52
  %449 = vmatprep.subr.mxu0 %v56
  %450 = vmatpush1.msra.mxu0 %v55
  %451 = vmatprep.subr.mxu0 %v59
  %452 = vmatpush1.msra.mxu0 %v58
  %453 = vmatprep.subr.mxu0 %v62
  %454 = vmatpush1.msra.mxu0 %v61
  %455 = vmatprep.subr.mxu0 %v65
  %456 = vmatpush1.msra.mxu0 %v64
  %457 = vmatprep.subr.mxu0 %v68
  %458 = vmatpush1.msra.mxu0 %v67
  %459 = vmatprep.subr.mxu0 %v71
  %460 = vmatpush1.msra.mxu0 %v70
  %461 = vmatprep.subr.mxu0 %v74
  %462 = vmatpush1.msra.mxu0 %v73
  %463 = vmatprep.subr.mxu0 %v77
  %464 = vmatpush1.msra.mxu0 %v76
  %465 = vmatprep.subr.mxu0 %v80
  %466 = vmatpush1.msra.mxu0 %v79
  %467 = vmatprep.subr.mxu0 %v83
  %468 = vmatpush1.msra.mxu0 %v82
  %469 = vmatprep.subr.mxu0 %v86
  %470 = vmatpush1.msra.mxu0 %v85
  %471 = vmatprep.subr.mxu0 %v89
  %472 = vmatpush1.msra.mxu0 %v88
  %473 = vmatprep.subr.mxu0 %v92
  %474 = vmatpush1.msra.mxu0 %v91
  %475 = vmatprep.subr.mxu0 %v95
  %476 = vmatpush1.msra.mxu0 %v94
  %477 = vmatprep.subr.mxu0 %v98
  %478 = vmatpush1.msra.mxu0 %v97
  %479 = vmatprep.subr.mxu0 %v101
  %480 = vmatpush1.msra.mxu0 %v100
  %481 = vmatprep.subr.mxu0 %v104
  %482 = vmatpush1.msra.mxu0 %v103
  %483 = vmatprep.subr.mxu0 %v107
  %484 = vmatpush1.msra.mxu0 %v106
  %485 = vmatprep.subr.mxu0 %v110
  %486 = vmatpush1.msra.mxu0 %v109
  %487 = vmatprep.subr.mxu0 %v113
  %488 = vmatpush1.msra.mxu0 %v112
  %489 = vmatprep.subr.mxu0 %v116
  %490 = vmatpush1.msra.mxu0 %v115
  %491 = vmatprep.subr.mxu0 %v119
  %492 = vmatpush1.msra.mxu0 %v118
  %493 = vmatprep.subr.mxu0 %v122
  %494 = vmatpush1.msra.mxu0 %v121
  %495 = vmatprep.subr.mxu0 %v125
  %496 = vmatpush1.msra.mxu0 %v124
  %497 = vmatprep.subr.mxu0 %v128
  %498 = vmatpush1.msra.mxu0 %v127
  %499 = vmatprep.mubr.f32.mxu0 %v27
  %500 = vmatmul.mubr.f32.gmra.mrb[0].mxu0 %v26
  %v501 = vpop.f32.mrb[0].mxu0
  %v502 = vadd.f32 %v423, %v501
  %v503 = vpop.f32.mrb[0].mxu0
  %v504 = vadd.f32 %v427, %v503
  %505 = vdwg.mxu0
  %506 = vmatprep.subr.mxu0 %v131
  %507 = vmatpush1.msra.mxu0 %v130
  %508 = vmatprep.subr.mxu0 %v134
  %509 = vmatpush1.msra.mxu0 %v133
  %510 = vmatprep.subr.mxu0 %v137
  %511 = vmatpush1.msra.mxu0 %v136
  %512 = vmatprep.subr.mxu0 %v140
  %513 = vmatpush1.msra.mxu0 %v139
  %514 = vmatprep.subr.mxu0 %v143
  %515 = vmatpush1.msra.mxu0 %v142
  %516 = vmatprep.subr.mxu0 %v146
  %517 = vmatpush1.msra.mxu0 %v145
  %518 = vmatprep.subr.mxu0 %v149
  %519 = vmatpush1.msra.mxu0 %v148
  %520 = vmatprep.subr.mxu0 %v152
  %521 = vmatpush1.msra.mxu0 %v151
  %522 = vmatprep.subr.mxu0 %v155
  %523 = vmatpush1.msra.mxu0 %v154
  %524 = vmatprep.subr.mxu0 %v158
  %525 = vmatpush1.msra.mxu0 %v157
  %526 = vmatprep.subr.mxu0 %v161
  %527 = vmatpush1.msra.mxu0 %v160
  %528 = vmatprep.subr.mxu0 %v164
  %529 = vmatpush1.msra.mxu0 %v163
  %530 = vmatprep.subr.mxu0 %v167
  %531 = vmatpush1.msra.mxu0 %v166
  %532 = vmatprep.subr.mxu0 %v170
  %533 = vmatpush1.msra.mxu0 %v169
  %534 = vmatprep.subr.mxu0 %v173
  %535 = vmatpush1.msra.mxu0 %v172
  %536 = vmatprep.subr.mxu0 %v176
  %537 = vmatpush1.msra.mxu0 %v175
  %538 = vmatprep.subr.mxu0 %v179
  %539 = vmatpush1.msra.mxu0 %v178
  %540 = vmatprep.subr.mxu0 %v182
  %541 = vmatpush1.msra.mxu0 %v181
  %542 = vmatprep.subr.mxu0 %v185
  %543 = vmatpush1.msra.mxu0 %v184
  %544 = vmatprep.subr.mxu0 %v188
  %545 = vmatpush1.msra.mxu0 %v187
  %546 = vmatprep.subr.mxu0 %v191
  %547 = vmatpush1.msra.mxu0 %v190
  %548 = vmatprep.subr.mxu0 %v194
  %549 = vmatpush1.msra.mxu0 %v193
  %550 = vmatprep.subr.mxu0 %v197
  %551 = vmatpush1.msra.mxu0 %v196
  %552 = vmatprep.subr.mxu0 %v200
  %553 = vmatpush1.msra.mxu0 %v199
  %554 = vmatprep.subr.mxu0 %v203
  %555 = vmatpush1.msra.mxu0 %v202
  %556 = vmatprep.subr.mxu0 %v206
  %557 = vmatpush1.msra.mxu0 %v205
  %558 = vmatprep.subr.mxu0 %v209
  %559 = vmatpush1.msra.mxu0 %v208
  %560 = vmatprep.subr.mxu0 %v212
  %561 = vmatpush1.msra.mxu0 %v211
  %562 = vmatprep.subr.mxu0 %v215
  %563 = vmatpush1.msra.mxu0 %v214
  %564 = vmatprep.subr.mxu0 %v218
  %565 = vmatpush1.msra.mxu0 %v217
  %566 = vmatprep.subr.mxu0 %v221
  %567 = vmatpush1.msra.mxu0 %v220
  %568 = vmatprep.subr.mxu0 %v224
  %569 = vmatpush1.msra.mxu0 %v223
  %570 = vmatprep.mubr.f32.mxu0 %v29
  %571 = vmatmul.mubr.f32.gmra.mrb[0].mxu0 %v28
  %v572 = vpop.f32.mrb[0].mxu0
  %v573 = vadd.f32 %v502, %v572
  %v574 = vpop.f32.mrb[0].mxu0
  %v575 = vadd.f32 %v504, %v574
  %576 = vdwg.mxu0
  %577 = vmatprep.subr.mxu0 %v227
  %578 = vmatpush1.msra.mxu0 %v226
  %579 = vmatprep.subr.mxu0 %v230
  %580 = vmatpush1.msra.mxu0 %v229
  %581 = vmatprep.subr.mxu0 %v233
  %582 = vmatpush1.msra.mxu0 %v232
  %583 = vmatprep.subr.mxu0 %v236
  %584 = vmatpush1.msra.mxu0 %v235
  %585 = vmatprep.subr.mxu0 %v239
  %586 = vmatpush1.msra.mxu0 %v238
  %587 = vmatprep.subr.mxu0 %v242
  %588 = vmatpush1.msra.mxu0 %v241
  %589 = vmatprep.subr.mxu0 %v245
  %590 = vmatpush1.msra.mxu0 %v244
  %591 = vmatprep.subr.mxu0 %v248
  %592 = vmatpush1.msra.mxu0 %v247
  %593 = vmatprep.subr.mxu0 %v251
  %594 = vmatpush1.msra.mxu0 %v250
  %595 = vmatprep.subr.mxu0 %v254
  %596 = vmatpush1.msra.mxu0 %v253
  %597 = vmatprep.subr.mxu0 %v257
  %598 = vmatpush1.msra.mxu0 %v256
  %599 = vmatprep.subr.mxu0 %v260
  %600 = vmatpush1.msra.mxu0 %v259
  %601 = vmatprep.subr.mxu0 %v263
  %602 = vmatpush1.msra.mxu0 %v262
  %603 = vmatprep.subr.mxu0 %v266
  %604 = vmatpush1.msra.mxu0 %v265
  %605 = vmatprep.subr.mxu0 %v269
  %606 = vmatpush1.msra.mxu0 %v268
  %607 = vmatprep.subr.mxu0 %v272
  %608 = vmatpush1.msra.mxu0 %v271
  %609 = vmatprep.subr.mxu0 %v275
  %610 = vmatpush1.msra.mxu0 %v274
  %611 = vmatprep.subr.mxu0 %v278
  %612 = vmatpush1.msra.mxu0 %v277
  %613 = vmatprep.subr.mxu0 %v281
  %614 = vmatpush1.msra.mxu0 %v280
  %615 = vmatprep.subr.mxu0 %v284
  %616 = vmatpush1.msra.mxu0 %v283
  %617 = vmatprep.subr.mxu0 %v287
  %618 = vmatpush1.msra.mxu0 %v286
  %619 = vmatprep.subr.mxu0 %v290
  %620 = vmatpush1.msra.mxu0 %v289
  %621 = vmatprep.subr.mxu0 %v293
  %622 = vmatpush1.msra.mxu0 %v292
  %623 = vmatprep.subr.mxu0 %v296
  %624 = vmatpush1.msra.mxu0 %v295
  %625 = vmatprep.subr.mxu0 %v299
  %626 = vmatpush1.msra.mxu0 %v298
  %627 = vmatprep.subr.mxu0 %v302
  %628 = vmatpush1.msra.mxu0 %v301
  %629 = vmatprep.subr.mxu0 %v305
  %630 = vmatpush1.msra.mxu0 %v304
  %631 = vmatprep.subr.mxu0 %v308
  %632 = vmatpush1.msra.mxu0 %v307
  %633 = vmatprep.subr.mxu0 %v311
  %634 = vmatpush1.msra.mxu0 %v310
  %635 = vmatprep.subr.mxu0 %v314
  %636 = vmatpush1.msra.mxu0 %v313
  %637 = vmatprep.subr.mxu0 %v317
  %638 = vmatpush1.msra.mxu0 %v316
  %639 = vmatprep.subr.mxu0 %v320
  %640 = vmatpush1.msra.mxu0 %v319
  %641 = vmatprep.mubr.f32.mxu0 %v31
  %642 = vmatmul.mubr.f32.gmra.mrb[0].mxu0 %v30
  %v643 = vpop.f32.mrb[0].mxu0
  %v644 = vadd.f32 %v573, %v643
  %v645 = vpop.f32.mrb[0].mxu0
  %v646 = vadd.f32 %v575, %v645
  %647 = vdwg.mxu0
  %648 = vmatprep.subr.mxu0 %v323
  %649 = vmatpush1.msra.mxu0 %v322
  %650 = vmatprep.subr.mxu0 %v326
  %651 = vmatpush1.msra.mxu0 %v325
  %652 = vmatprep.subr.mxu0 %v329
  %653 = vmatpush1.msra.mxu0 %v328
  %654 = vmatprep.subr.mxu0 %v332
  %655 = vmatpush1.msra.mxu0 %v331
  %656 = vmatprep.subr.mxu0 %v335
  %657 = vmatpush1.msra.mxu0 %v334
  %658 = vmatprep.subr.mxu0 %v338
  %659 = vmatpush1.msra.mxu0 %v337
  %660 = vmatprep.subr.mxu0 %v341
  %661 = vmatpush1.msra.mxu0 %v340
  %662 = vmatprep.subr.mxu0 %v344
  %663 = vmatpush1.msra.mxu0 %v343
  %664 = vmatprep.subr.mxu0 %v347
  %665 = vmatpush1.msra.mxu0 %v346
  %666 = vmatprep.subr.mxu0 %v350
  %667 = vmatpush1.msra.mxu0 %v349
  %668 = vmatprep.subr.mxu0 %v353
  %669 = vmatpush1.msra.mxu0 %v352
  %670 = vmatprep.subr.mxu0 %v356
  %671 = vmatpush1.msra.mxu0 %v355
  %672 = vmatprep.subr.mxu0 %v359
  %673 = vmatpush1.msra.mxu0 %v358
  %674 = vmatprep.subr.mxu0 %v362
  %675 = vmatpush1.msra.mxu0 %v361
  %676 = vmatprep.subr.mxu0 %v365
  %677 = vmatpush1.msra.mxu0 %v364
  %678 = vmatprep.subr.mxu0 %v368
  %679 = vmatpush1.msra.mxu0 %v367
  %680 = vmatprep.subr.mxu0 %v371
  %681 = vmatpush1.msra.mxu0 %v370
  %682 = vmatprep.subr.mxu0 %v374
  %683 = vmatpush1.msra.mxu0 %v373
  %684 = vmatprep.subr.mxu0 %v377
  %685 = vmatpush1.msra.mxu0 %v376
  %686 = vmatprep.subr.mxu0 %v380
  %687 = vmatpush1.msra.mxu0 %v379
  %688 = vmatprep.subr.mxu0 %v383
  %689 = vmatpush1.msra.mxu0 %v382
  %690 = vmatprep.subr.mxu0 %v386
  %691 = vmatpush1.msra.mxu0 %v385
  %692 = vmatprep.subr.mxu0 %v389
  %693 = vmatpush1.msra.mxu0 %v388
  %694 = vmatprep.subr.mxu0 %v392
  %695 = vmatpush1.msra.mxu0 %v391
  %696 = vmatprep.subr.mxu0 %v395
  %697 = vmatpush1.msra.mxu0 %v394
  %698 = vmatprep.subr.mxu0 %v398
  %699 = vmatpush1.msra.mxu0 %v397
  %700 = vmatprep.subr.mxu0 %v401
  %701 = vmatpush1.msra.mxu0 %v400
  %702 = vmatprep.subr.mxu0 %v404
  %703 = vmatpush1.msra.mxu0 %v403
  %704 = vmatprep.subr.mxu0 %v407
  %705 = vmatpush1.msra.mxu0 %v406
  %706 = vmatprep.subr.mxu0 %v410
  %707 = vmatpush1.msra.mxu0 %v409
  %708 = vmatprep.subr.mxu0 %v413
  %709 = vmatpush1.msra.mxu0 %v412
  %710 = vmatprep.subr.mxu0 %v416
  %711 = vmatpush1.msra.mxu0 %v415
  %712 = vmatprep.mubr.f32.mxu0 %v33
  %713 = vmatmul.mubr.f32.gmra.mrb[0].mxu0 %v32
  %v714 = vpop.f32.mrb[0].mxu0
  %v715 = vadd.f32 %v644, %v714
  %v716 = vpop.f32.mrb[0].mxu0
  %v717 = vadd.f32 %v646, %v716
  %718 = vdwg.mxu0
  %719 = vmatprep.subr.mxu0 0.0
  %720 = vmatpush1.msra.mxu0 %v36
  %721 = vmatprep.subr.mxu0 0.0
  %722 = vmatpush1.msra.mxu0 %v39
  %723 = vmatprep.subr.mxu0 0.0
  %724 = vmatpush1.msra.mxu0 %v42
  %725 = vmatprep.subr.mxu0 0.0
  %726 = vmatpush1.msra.mxu0 %v45
  %727 = vmatprep.subr.mxu0 0.0
  %728 = vmatpush1.msra.mxu0 %v48
  %729 = vmatprep.subr.mxu0 0.0
  %730 = vmatpush1.msra.mxu0 %v51
  %731 = vmatprep.subr.mxu0 0.0
  %732 = vmatpush1.msra.mxu0 %v54
  %733 = vmatprep.subr.mxu0 0.0
  %734 = vmatpush1.msra.mxu0 %v57
  %735 = vmatprep.subr.mxu0 0.0
  %736 = vmatpush1.msra.mxu0 %v60
  %737 = vmatprep.subr.mxu0 0.0
  %738 = vmatpush1.msra.mxu0 %v63
  %739 = vmatprep.subr.mxu0 0.0
  %740 = vmatpush1.msra.mxu0 %v66
  %741 = vmatprep.subr.mxu0 0.0
  %742 = vmatpush1.msra.mxu0 %v69
  %743 = vmatprep.subr.mxu0 0.0
  %744 = vmatpush1.msra.mxu0 %v72
  %745 = vmatprep.subr.mxu0 0.0
  %746 = vmatpush1.msra.mxu0 %v75
  %747 = vmatprep.subr.mxu0 0.0
  %748 = vmatpush1.msra.mxu0 %v78
  %749 = vmatprep.subr.mxu0 0.0
  %750 = vmatpush1.msra.mxu0 %v81
  %751 = vmatprep.subr.mxu0 0.0
  %752 = vmatpush1.msra.mxu0 %v84
  %753 = vmatprep.subr.mxu0 0.0
  %754 = vmatpush1.msra.mxu0 %v87
  %755 = vmatprep.subr.mxu0 0.0
  %756 = vmatpush1.msra.mxu0 %v90
  %757 = vmatprep.subr.mxu0 0.0
  %758 = vmatpush1.msra.mxu0 %v93
  %759 = vmatprep.subr.mxu0 0.0
  %760 = vmatpush1.msra.mxu0 %v96
  %761 = vmatprep.subr.mxu0 0.0
  %762 = vmatpush1.msra.mxu0 %v99
  %763 = vmatprep.subr.mxu0 0.0
  %764 = vmatpush1.msra.mxu0 %v102
  %765 = vmatprep.subr.mxu0 0.0
  %766 = vmatpush1.msra.mxu0 %v105
  %767 = vmatprep.subr.mxu0 0.0
  %768 = vmatpush1.msra.mxu0 %v108
  %769 = vmatprep.subr.mxu0 0.0
  %770 = vmatpush1.msra.mxu0 %v111
  %771 = vmatprep.subr.mxu0 0.0
  %772 = vmatpush1.msra.mxu0 %v114
  %773 = vmatprep.subr.mxu0 0.0
  %774 = vmatpush1.msra.mxu0 %v117
  %775 = vmatprep.subr.mxu0 0.0
  %776 = vmatpush1.msra.mxu0 %v120
  %777 = vmatprep.subr.mxu0 0.0
  %778 = vmatpush1.msra.mxu0 %v123
  %779 = vmatprep.subr.mxu0 0.0
  %780 = vmatpush1.msra.mxu0 %v126
  %781 = vmatprep.subr.mxu0 0.0
  %782 = vmatpush1.msra.mxu0 %v129
  %783 = vmatprep.mubr.f32.mxu0 %v27
  %784 = vmatmul.mubr.f32.gmra.mrb[0].mxu0 %v26
  %v785 = vpop.f32.mrb[0].mxu0
  %v786 = vadd.f32 %v431, %v785
  %v787 = vpop.f32.mrb[0].mxu0
  %788 = vdwg.mxu0
  %789 = vmatprep.subr.mxu0 0.0
  %790 = vmatpush1.msra.mxu0 %v132
  %791 = vmatprep.subr.mxu0 0.0
  %792 = vmatpush1.msra.mxu0 %v135
  %793 = vmatprep.subr.mxu0 0.0
  %794 = vmatpush1.msra.mxu0 %v138
  %795 = vmatprep.subr.mxu0 0.0
  %796 = vmatpush1.msra.mxu0 %v141
  %797 = vmatprep.subr.mxu0 0.0
  %798 = vmatpush1.msra.mxu0 %v144
  %799 = vmatprep.subr.mxu0 0.0
  %800 = vmatpush1.msra.mxu0 %v147
  %801 = vmatprep.subr.mxu0 0.0
  %802 = vmatpush1.msra.mxu0 %v150
  %803 = vmatprep.subr.mxu0 0.0
  %804 = vmatpush1.msra.mxu0 %v153
  %805 = vmatprep.subr.mxu0 0.0
  %806 = vmatpush1.msra.mxu0 %v156
  %807 = vmatprep.subr.mxu0 0.0
  %808 = vmatpush1.msra.mxu0 %v159
  %809 = vmatprep.subr.mxu0 0.0
  %810 = vmatpush1.msra.mxu0 %v162
  %811 = vmatprep.subr.mxu0 0.0
  %812 = vmatpush1.msra.mxu0 %v165
  %813 = vmatprep.subr.mxu0 0.0
  %814 = vmatpush1.msra.mxu0 %v168
  %815 = vmatprep.subr.mxu0 0.0
  %816 = vmatpush1.msra.mxu0 %v171
  %817 = vmatprep.subr.mxu0 0.0
  %818 = vmatpush1.msra.mxu0 %v174
  %819 = vmatprep.subr.mxu0 0.0
  %820 = vmatpush1.msra.mxu0 %v177
  %821 = vmatprep.subr.mxu0 0.0
  %822 = vmatpush1.msra.mxu0 %v180
  %823 = vmatprep.subr.mxu0 0.0
  %824 = vmatpush1.msra.mxu0 %v183
  %825 = vmatprep.subr.mxu0 0.0
  %826 = vmatpush1.msra.mxu0 %v186
  %827 = vmatprep.subr.mxu0 0.0
  %828 = vmatpush1.msra.mxu0 %v189
  %829 = vmatprep.subr.mxu0 0.0
  %830 = vmatpush1.msra.mxu0 %v192
  %831 = vmatprep.subr.mxu0 0.0
  %832 = vmatpush1.msra.mxu0 %v195
  %833 = vmatprep.subr.mxu0 0.0
  %834 = vmatpush1.msra.mxu0 %v198
  %835 = vmatprep.subr.mxu0 0.0
  %836 = vmatpush1.msra.mxu0 %v201
  %837 = vmatprep.subr.mxu0 0.0
  %838 = vmatpush1.msra.mxu0 %v204
  %839 = vmatprep.subr.mxu0 0.0
  %840 = vmatpush1.msra.mxu0 %v207
  %841 = vmatprep.subr.mxu0 0.0
  %842 = vmatpush1.msra.mxu0 %v210
  %843 = vmatprep.subr.mxu0 0.0
  %844 = vmatpush1.msra.mxu0 %v213
  %845 = vmatprep.subr.mxu0 0.0
  %846 = vmatpush1.msra.mxu0 %v216
  %847 = vmatprep.subr.mxu0 0.0
  %848 = vmatpush1.msra.mxu0 %v219
  %849 = vmatprep.subr.mxu0 0.0
  %850 = vmatpush1.msra.mxu0 %v222
  %851 = vmatprep.subr.mxu0 0.0
  %852 = vmatpush1.msra.mxu0 %v225
  %853 = vmatprep.mubr.f32.mxu0 %v29
  %854 = vmatmul.mubr.f32.gmra.mrb[0].mxu0 %v28
  %v855 = vpop.f32.mrb[0].mxu0
  %v856 = vadd.f32 %v786, %v855
  %v857 = vpop.f32.mrb[0].mxu0
  %858 = vdwg.mxu0
  %859 = vmatprep.subr.mxu0 0.0
  %860 = vmatpush1.msra.mxu0 %v228
  %861 = vmatprep.subr.mxu0 0.0
  %862 = vmatpush1.msra.mxu0 %v231
  %863 = vmatprep.subr.mxu0 0.0
  %864 = vmatpush1.msra.mxu0 %v234
  %865 = vmatprep.subr.mxu0 0.0
  %866 = vmatpush1.msra.mxu0 %v237
  %867 = vmatprep.subr.mxu0 0.0
  %868 = vmatpush1.msra.mxu0 %v240
  %869 = vmatprep.subr.mxu0 0.0
  %870 = vmatpush1.msra.mxu0 %v243
  %871 = vmatprep.subr.mxu0 0.0
  %872 = vmatpush1.msra.mxu0 %v246
  %873 = vmatprep.subr.mxu0 0.0
  %874 = vmatpush1.msra.mxu0 %v249
  %875 = vmatprep.subr.mxu0 0.0
  %876 = vmatpush1.msra.mxu0 %v252
  %877 = vmatprep.subr.mxu0 0.0
  %878 = vmatpush1.msra.mxu0 %v255
  %879 = vmatprep.subr.mxu0 0.0
  %880 = vmatpush1.msra.mxu0 %v258
  %881 = vmatprep.subr.mxu0 0.0
  %882 = vmatpush1.msra.mxu0 %v261
  %883 = vmatprep.subr.mxu0 0.0
  %884 = vmatpush1.msra.mxu0 %v264
  %885 = vmatprep.subr.mxu0 0.0
  %886 = vmatpush1.msra.mxu0 %v267
  %887 = vmatprep.subr.mxu0 0.0
  %888 = vmatpush1.msra.mxu0 %v270
  %889 = vmatprep.subr.mxu0 0.0
  %890 = vmatpush1.msra.mxu0 %v273
  %891 = vmatprep.subr.mxu0 0.0
  %892 = vmatpush1.msra.mxu0 %v276
  %893 = vmatprep.subr.mxu0 0.0
  %894 = vmatpush1.msra.mxu0 %v279
  %895 = vmatprep.subr.mxu0 0.0
  %896 = vmatpush1.msra.mxu0 %v282
  %897 = vmatprep.subr.mxu0 0.0
  %898 = vmatpush1.msra.mxu0 %v285
  %899 = vmatprep.subr.mxu0 0.0
  %900 = vmatpush1.msra.mxu0 %v288
  %901 = vmatprep.subr.mxu0 0.0
  %902 = vmatpush1.msra.mxu0 %v291
  %903 = vmatprep.subr.mxu0 0.0
  %904 = vmatpush1.msra.mxu0 %v294
  %905 = vmatprep.subr.mxu0 0.0
  %906 = vmatpush1.msra.mxu0 %v297
  %907 = vmatprep.subr.mxu0 0.0
  %908 = vmatpush1.msra.mxu0 %v300
  %909 = vmatprep.subr.mxu0 0.0
  %910 = vmatpush1.msra.mxu0 %v303
  %911 = vmatprep.subr.mxu0 0.0
  %912 = vmatpush1.msra.mxu0 %v306
  %913 = vmatprep.subr.mxu0 0.0
  %914 = vmatpush1.msra.mxu0 %v309
  %915 = vmatprep.subr.mxu0 0.0
  %916 = vmatpush1.msra.mxu0 %v312
  %917 = vmatprep.subr.mxu0 0.0
  %918 = vmatpush1.msra.mxu0 %v315
  %919 = vmatprep.subr.mxu0 0.0
  %920 = vmatpush1.msra.mxu0 %v318
  %921 = vmatprep.subr.mxu0 0.0
  %922 = vmatpush1.msra.mxu0 %v321
  %923 = vmatprep.mubr.f32.mxu0 %v31
  %924 = vmatmul.mubr.f32.gmra.mrb[0].mxu0 %v30
  %v925 = vpop.f32.mrb[0].mxu0
  %v926 = vadd.f32 %v856, %v925
  %v927 = vpop.f32.mrb[0].mxu0
  %928 = vdwg.mxu0
  %929 = vmatprep.subr.mxu0 0.0
  %930 = vmatpush1.msra.mxu0 %v324
  %931 = vmatprep.subr.mxu0 0.0
  %932 = vmatpush1.msra.mxu0 %v327
  %933 = vmatprep.subr.mxu0 0.0
  %934 = vmatpush1.msra.mxu0 %v330
  %935 = vmatprep.subr.mxu0 0.0
  %936 = vmatpush1.msra.mxu0 %v333
  %937 = vmatprep.subr.mxu0 0.0
  %938 = vmatpush1.msra.mxu0 %v336
  %939 = vmatprep.subr.mxu0 0.0
  %940 = vmatpush1.msra.mxu0 %v339
  %941 = vmatprep.subr.mxu0 0.0
  %942 = vmatpush1.msra.mxu0 %v342
  %943 = vmatprep.subr.mxu0 0.0
  %944 = vmatpush1.msra.mxu0 %v345
  %945 = vmatprep.subr.mxu0 0.0
  %946 = vmatpush1.msra.mxu0 %v348
  %947 = vmatprep.subr.mxu0 0.0
  %948 = vmatpush1.msra.mxu0 %v351
  %949 = vmatprep.subr.mxu0 0.0
  %950 = vmatpush1.msra.mxu0 %v354
  %951 = vmatprep.subr.mxu0 0.0
  %952 = vmatpush1.msra.mxu0 %v357
  %953 = vmatprep.subr.mxu0 0.0
  %954 = vmatpush1.msra.mxu0 %v360
  %955 = vmatprep.subr.mxu0 0.0
  %956 = vmatpush1.msra.mxu0 %v363
  %957 = vmatprep.subr.mxu0 0.0
  %958 = vmatpush1.msra.mxu0 %v366
  %959 = vmatprep.subr.mxu0 0.0
  %960 = vmatpush1.msra.mxu0 %v369
  %961 = vmatprep.subr.mxu0 0.0
  %962 = vmatpush1.msra.mxu0 %v372
  %963 = vmatprep.subr.mxu0 0.0
  %964 = vmatpush1.msra.mxu0 %v375
  %965 = vmatprep.subr.mxu0 0.0
  %966 = vmatpush1.msra.mxu0 %v378
  %967 = vmatprep.subr.mxu0 0.0
  %968 = vmatpush1.msra.mxu0 %v381
  %969 = vmatprep.subr.mxu0 0.0
  %970 = vmatpush1.msra.mxu0 %v384
  %971 = vmatprep.subr.mxu0 0.0
  %972 = vmatpush1.msra.mxu0 %v387
  %973 = vmatprep.subr.mxu0 0.0
  %974 = vmatpush1.msra.mxu0 %v390
  %975 = vmatprep.subr.mxu0 0.0
  %976 = vmatpush1.msra.mxu0 %v393
  %977 = vmatprep.subr.mxu0 0.0
  %978 = vmatpush1.msra.mxu0 %v396
  %979 = vmatprep.subr.mxu0 0.0
  %980 = vmatpush1.msra.mxu0 %v399
  %981 = vmatprep.subr.mxu0 0.0
  %982 = vmatpush1.msra.mxu0 %v402
  %983 = vmatprep.subr.mxu0 0.0
  %984 = vmatpush1.msra.mxu0 %v405
  %985 = vmatprep.subr.mxu0 0.0
  %986 = vmatpush1.msra.mxu0 %v408
  %987 = vmatprep.subr.mxu0 0.0
  %988 = vmatpush1.msra.mxu0 %v411
  %989 = vmatprep.subr.mxu0 0.0
  %990 = vmatpush1.msra.mxu0 %v414
  %991 = vmatprep.subr.mxu0 0.0
  %992 = vmatpush1.msra.mxu0 %v417
  %993 = vmatprep.mubr.f32.mxu0 %v33
  %994 = vmatmul.mubr.f32.gmra.mrb[0].mxu0 %v32
  %v995 = vpop.f32.mrb[0].mxu0
  %v996 = vadd.f32 %v926, %v995
  %v997 = vpop.f32.mrb[0].mxu0
  %998 = vdwg.mxu0
  %v999 = vmax.f32 %v715, 0.0
  %v1000 = vmax.f32 %v717, 0.0
  %v1001 = vmax.f32 %v996, 0.0
  %v1002 = vld [vmem:[%s3] sm:$0xff]
  %v1003 = vld [vmem:[%s3 + $0x8] sm:$0xff]
  %v1004 = vld [vmem:[%s3 + $0x10] sm:$0xff]
  %v1005 = vld [vmem:[%s3 + $0x18] sm:$0xff]
  %v1006 = vld [vmem:[%s3 + $0x20] sm:$0xff]
  %v1007 = vld [vmem:[%s3 + $0x28] sm:$0xff]
  %v1008 = vld [vmem:[%s3 + $0x30] sm:$0xff]
  %v1009 = vld [vmem:[%s3 + $0x38] sm:$0xff]
  %v1010 = vld [vmem:[%s3 + $0x40] sm:$0xff]
  %v1011 = vld [vmem:[%s3 + $0x48] sm:$0xff]
  %v1012 = vld [vmem:[%s3 + $0x50] sm:$0xff]
  %v1013 = vld [vmem:[%s3 + $0x58] sm:$0xff]
  %v1014 = vld [vmem:[%s3 + $0x60] sm:$0xff]
  %v1015 = vld [vmem:[%s3 + $0x68] sm:$0xff]
  %v1016 = vld [vmem:[%s3 + $0x70] sm:$0xff]
  %v1017 = vld [vmem:[%s3 + $0x78] sm:$0xff]
  %v1018 = vld [vmem:[%s3 + $0x80] sm:$0xff]
  %v1019 = vld [vmem:[%s3 + $0x88] sm:$0xff]
  %v1020 = vld [vmem:[%s3 + $0x90] sm:$0xff]
  %v1021 = vld [vmem:[%s3 + $0x98] sm:$0xff]
  %v1022 = vld [vmem:[%s3 + $0xa0] sm:$0xff]
  %v1023 = vld [vmem:[%s3 + $0xa8] sm:$0xff]
  %v1024 = vld [vmem:[%s3 + $0xb0] sm:$0xff]
  %v1025 = vld [vmem:[%s3 + $0xb8] sm:$0xff]
  %v1026 = vld [vmem:[%s3 + $0xc0] sm:$0xff]
  %v1027 = vld [vmem:[%s3 + $0xc8] sm:$0xff]
  %v1028 = vld [vmem:[%s3 + $0xd0] sm:$0xff]
  %v1029 = vld [vmem:[%s3 + $0xd8] sm:$0xff]
  %v1030 = vld [vmem:[%s3 + $0xe0] sm:$0xff]
  %v1031 = vld [vmem:[%s3 + $0xe8] sm:$0xff]
  %v1032 = vld [vmem:[%s3 + $0xf0] sm:$0xff]
  %v1033 = vld [vmem:[%s3 + $0xf8] sm:$0xff]
  %v1034 = vld [vmem:[%s3 + $0x100] sm:$0xff]
  %v1035 = vld [vmem:[%s3 + $0x108] sm:$0xff]
  %v1036 = vld [vmem:[%s3 + $0x110] sm:$0xff]
  %v1037 = vld [vmem:[%s3 + $0x118] sm:$0xff]
  %v1038 = vld [vmem:[%s3 + $0x120] sm:$0xff]
  %v1039 = vld [vmem:[%s3 + $0x128] sm:$0xff]
  %v1040 = vld [vmem:[%s3 + $0x130] sm:$0xff]
  %v1041 = vld [vmem:[%s3 + $0x138] sm:$0xff]
  %v1042 = vld [vmem:[%s3 + $0x140] sm:$0xff]
  %v1043 = vld [vmem:[%s3 + $0x148] sm:$0xff]
  %v1044 = vld [vmem:[%s3 + $0x150] sm:$0xff]
  %v1045 = vld [vmem:[%s3 + $0x158] sm:$0xff]
  %v1046 = vld [vmem:[%s3 + $0x160] sm:$0xff]
  %v1047 = vld [vmem:[%s3 + $0x168] sm:$0xff]
  %v1048 = vld [vmem:[%s3 + $0x170] sm:$0xff]
  %v1049 = vld [vmem:[%s3 + $0x178] sm:$0xff]
  %v1050 = vld [vmem:[%s4] sm:$0x1]
  %v1052 = vlaneseq
  %v1053 = vshrl.u32 %v1052, 7
  %v1054 = vsub.s32 0, %v1053
  %v1055 = vrot.slane %v1050, %v1054
  %1057 = vmatprep.subr.mxu0 0.0
  %1058 = vmatpush1.msra.mxu0 %v1002
  %1059 = vmatprep.subr.mxu0 0.0
  %1060 = vmatpush1.msra.mxu0 %v1003
  %1061 = vmatprep.subr.mxu0 0.0
  %1062 = vmatpush1.msra.mxu0 %v1004
  %1063 = vmatprep.subr.mxu0 0.0
  %1064 = vmatpush1.msra.mxu0 %v1005
  %1065 = vmatprep.subr.mxu0 0.0
  %1066 = vmatpush1.msra.mxu0 %v1006
  %1067 = vmatprep.subr.mxu0 0.0
  %1068 = vmatpush1.msra.mxu0 %v1007
  %1069 = vmatprep.subr.mxu0 0.0
  %1070 = vmatpush1.msra.mxu0 %v1008
  %1071 = vmatprep.subr.mxu0 0.0
  %1072 = vmatpush1.msra.mxu0 %v1009
  %1073 = vmatprep.subr.mxu0 0.0
  %1074 = vmatpush1.msra.mxu0 %v1010
  %1075 = vmatprep.subr.mxu0 0.0
  %1076 = vmatpush1.msra.mxu0 %v1011
  %1077 = vmatprep.subr.mxu0 0.0
  %1078 = vmatpush1.msra.mxu0 %v1012
  %1079 = vmatprep.subr.mxu0 0.0
  %1080 = vmatpush1.msra.mxu0 %v1013
  %1081 = vmatprep.subr.mxu0 0.0
  %1082 = vmatpush1.msra.mxu0 %v1014
  %1083 = vmatprep.subr.mxu0 0.0
  %1084 = vmatpush1.msra.mxu0 %v1015
  %1085 = vmatprep.subr.mxu0 0.0
  %1086 = vmatpush1.msra.mxu0 %v1016
  %1087 = vmatprep.subr.mxu0 0.0
  %1088 = vmatpush1.msra.mxu0 %v1017
  %1089 = vmatprep.subr.mxu0 0.0
  %1090 = vmatpush1.msra.mxu0 %v1018
  %1091 = vmatprep.subr.mxu0 0.0
  %1092 = vmatpush1.msra.mxu0 %v1019
  %1093 = vmatprep.subr.mxu0 0.0
  %1094 = vmatpush1.msra.mxu0 %v1020
  %1095 = vmatprep.subr.mxu0 0.0
  %1096 = vmatpush1.msra.mxu0 %v1021
  %1097 = vmatprep.subr.mxu0 0.0
  %1098 = vmatpush1.msra.mxu0 %v1022
  %1099 = vmatprep.subr.mxu0 0.0
  %1100 = vmatpush1.msra.mxu0 %v1023
  %1101 = vmatprep.subr.mxu0 0.0
  %1102 = vmatpush1.msra.mxu0 %v1024
  %1103 = vmatprep.subr.mxu0 0.0
  %1104 = vmatpush1.msra.mxu0 %v1025
  %1105 = vmatprep.subr.mxu0 0.0
  %1106 = vmatpush1.msra.mxu0 %v1026
  %1107 = vmatprep.subr.mxu0 0.0
  %1108 = vmatpush1.msra.mxu0 %v1027
  %1109 = vmatprep.subr.mxu0 0.0
  %1110 = vmatpush1.msra.mxu0 %v1028
  %1111 = vmatprep.subr.mxu0 0.0
  %1112 = vmatpush1.msra.mxu0 %v1029
  %1113 = vmatprep.subr.mxu0 0.0
  %1114 = vmatpush1.msra.mxu0 %v1030
  %1115 = vmatprep.subr.mxu0 0.0
  %1116 = vmatpush1.msra.mxu0 %v1031
  %1117 = vmatprep.subr.mxu0 0.0
  %1118 = vmatpush1.msra.mxu0 %v1032
  %1119 = vmatprep.subr.mxu0 0.0
  %1120 = vmatpush1.msra.mxu0 %v1033
  %1121 = vmatprep.mubr.f32.mxu0 %v1000
  %1122 = vmatmul.mubr.f32.gmra.mrb[0].mxu0 %v999
  %v1123 = vpop.f32.mrb[0].mxu0
  %v1124 = vadd.f32 %v1055, %v1123
  %v1125 = vpop.f32.mrb[0].mxu0
  %1126 = vdwg.mxu0
  %1127 = vmatprep.subr.mxu0 0.0
  %1128 = vmatpush1.msra.mxu0 %v1034
  %1129 = vmatprep.subr.mxu0 0.0
  %1130 = vmatpush1.msra.mxu0 %v1035
  %1131 = vmatprep.subr.mxu0 0.0
  %1132 = vmatpush1.msra.mxu0 %v1036
  %1133 = vmatprep.subr.mxu0 0.0
  %1134 = vmatpush1.msra.mxu0 %v1037
  %1135 = vmatprep.subr.mxu0 0.0
  %1136 = vmatpush1.msra.mxu0 %v1038
  %1137 = vmatprep.subr.mxu0 0.0
  %1138 = vmatpush1.msra.mxu0 %v1039
  %1139 = vmatprep.subr.mxu0 0.0
  %1140 = vmatpush1.msra.mxu0 %v1040
  %1141 = vmatprep.subr.mxu0 0.0
  %1142 = vmatpush1.msra.mxu0 %v1041
  %1143 = vmatprep.subr.mxu0 0.0
  %1144 = vmatpush1.msra.mxu0 %v1042
  %1145 = vmatprep.subr.mxu0 0.0
  %1146 = vmatpush1.msra.mxu0 %v1043
  %1147 = vmatprep.subr.mxu0 0.0
  %1148 = vmatpush1.msra.mxu0 %v1044
  %1149 = vmatprep.subr.mxu0 0.0
  %1150 = vmatpush1.msra.mxu0 %v1045
  %1151 = vmatprep.subr.mxu0 0.0
  %1152 = vmatpush1.msra.mxu0 %v1046
  %1153 = vmatprep.subr.mxu0 0.0
  %1154 = vmatpush1.msra.mxu0 %v1047
  %1155 = vmatprep.subr.mxu0 0.0
  %1156 = vmatpush1.msra.mxu0 %v1048
  %1157 = vmatprep.subr.mxu0 0.0
  %1158 = vmatpush1.msra.mxu0 %v1049
  %1159 = vmatprep.subr.mxu0 0.0
  %1160 = vmatpush1.msra.mxu0 0.0
  %1161 = vmatprep.subr.mxu0 0.0
  %1162 = vmatpush1.msra.mxu0 0.0
  %1163 = vmatprep.subr.mxu0 0.0
  %1164 = vmatpush1.msra.mxu0 0.0
  %1165 = vmatprep.subr.mxu0 0.0
  %1166 = vmatpush1.msra.mxu0 0.0
  %1167 = vmatprep.subr.mxu0 0.0
  %1168 = vmatpush1.msra.mxu0 0.0
  %1169 = vmatprep.subr.mxu0 0.0
  %1170 = vmatpush1.msra.mxu0 0.0
  %1171 = vmatprep.subr.mxu0 0.0
  %1172 = vmatpush1.msra.mxu0 0.0
  %1173 = vmatprep.subr.mxu0 0.0
  %1174 = vmatpush1.msra.mxu0 0.0
  %1175 = vmatprep.subr.mxu0 0.0
  %1176 = vmatpush1.msra.mxu0 0.0
  %1177 = vmatprep.subr.mxu0 0.0
  %1178 = vmatpush1.msra.mxu0 0.0
  %1179 = vmatprep.subr.mxu0 0.0
  %1180 = vmatpush1.msra.mxu0 0.0
  %1181 = vmatprep.subr.mxu0 0.0
  %1182 = vmatpush1.msra.mxu0 0.0
  %1183 = vmatprep.subr.mxu0 0.0
  %1184 = vmatpush1.msra.mxu0 0.0
  %1185 = vmatprep.subr.mxu0 0.0
  %1186 = vmatpush1.msra.mxu0 0.0
  %1187 = vmatprep.subr.mxu0 0.0
  %1188 = vmatpush1.msra.mxu0 0.0
  %1189 = vmatprep.subr.mxu0 0.0
  %1190 = vmatpush1.msra.mxu0 0.0
  %1191 = vmatprep.mubr.f32.mxu0 0.0
  %1192 = vmatmul.mubr.f32.gmra.mrb[0].mxu0 %v1001
  %v1193 = vpop.f32.mrb[0].mxu0
  %v1194 = vadd.f32 %v1124, %v1193
  %v1195 = vpop.f32.mrb[0].mxu0
  %1196 = vdwg.mxu0
  %v1197 = vmax.f32 %v1194, 0.0
  %v1198 = vld [vmem:[%s5] sm:$0xff]
  %v1199 = vld [vmem:[%s5 + $0x8] sm:$0xff]
  %v1200 = vld [vmem:[%s5 + $0x10] sm:$0xff]
  %v1201 = vld [vmem:[%s5 + $0x18] sm:$0xff]
  %v1202 = vld [vmem:[%s5 + $0x20] sm:$0xff]
  %v1203 = vld [vmem:[%s5 + $0x28] sm:$0xff]
  %v1204 = vld [vmem:[%s5 + $0x30] sm:$0xff]
  %v1205 = vld [vmem:[%s5 + $0x38] sm:$0xff]
  %v1206 = vld [vmem:[%s5 + $0x40] sm:$0xff]
  %v1207 = vld [vmem:[%s5 + $0x48] sm:$0xff]
  %v1208 = vld [vmem:[%s5 + $0x50] sm:$0xff]
  %v1209 = vld [vmem:[%s5 + $0x58] sm:$0xff]
  %v1210 = vld [vmem:[%s5 + $0x60] sm:$0xff]
  %v1211 = vld [vmem:[%s5 + $0x68] sm:$0xff]
  %v1212 = vld [vmem:[%s5 + $0x70] sm:$0xff]
  %v1213 = vld [vmem:[%s5 + $0x78] sm:$0xff]
  %v1214 = vld [vmem:[%s6] sm:$0x1]
  %v1216 = vlaneseq
  %v1217 = vshrl.u32 %v1216, 7
  %v1218 = vsub.s32 0, %v1217
  %v1219 = vrot.slane %v1214, %v1218
  %1221 = vmatprep.subr.mxu0 0.0
  %1222 = vmatpush1.msra.mxu0 %v1198
  %1223 = vmatprep.subr.mxu0 0.0
  %1224 = vmatpush1.msra.mxu0 %v1199
  %1225 = vmatprep.subr.mxu0 0.0
  %1226 = vmatpush1.msra.mxu0 %v1200
  %1227 = vmatprep.subr.mxu0 0.0
  %1228 = vmatpush1.msra.mxu0 %v1201
  %1229 = vmatprep.subr.mxu0 0.0
  %1230 = vmatpush1.msra.mxu0 %v1202
  %1231 = vmatprep.subr.mxu0 0.0
  %1232 = vmatpush1.msra.mxu0 %v1203
  %1233 = vmatprep.subr.mxu0 0.0
  %1234 = vmatpush1.msra.mxu0 %v1204
  %1235 = vmatprep.subr.mxu0 0.0
  %1236 = vmatpush1.msra.mxu0 %v1205
  %1237 = vmatprep.subr.mxu0 0.0
  %1238 = vmatpush1.msra.mxu0 %v1206
  %1239 = vmatprep.subr.mxu0 0.0
  %1240 = vmatpush1.msra.mxu0 %v1207
  %1241 = vmatprep.subr.mxu0 0.0
  %1242 = vmatpush1.msra.mxu0 %v1208
  %1243 = vmatprep.subr.mxu0 0.0
  %1244 = vmatpush1.msra.mxu0 %v1209
  %1245 = vmatprep.subr.mxu0 0.0
  %1246 = vmatpush1.msra.mxu0 %v1210
  %1247 = vmatprep.subr.mxu0 0.0
  %1248 = vmatpush1.msra.mxu0 %v1211
  %1249 = vmatprep.subr.mxu0 0.0
  %1250 = vmatpush1.msra.mxu0 %v1212
  %1251 = vmatprep.subr.mxu0 0.0
  %1252 = vmatpush1.msra.mxu0 %v1213
  %1253 = vmatprep.subr.mxu0 0.0
  %1254 = vmatpush1.msra.mxu0 0.0
  %1255 = vmatprep.subr.mxu0 0.0
  %1256 = vmatpush1.msra.mxu0 0.0
  %1257 = vmatprep.subr.mxu0 0.0
  %1258 = vmatpush1.msra.mxu0 0.0
  %1259 = vmatprep.subr.mxu0 0.0
  %1260 = vmatpush1.msra.mxu0 0.0
  %1261 = vmatprep.subr.mxu0 0.0
  %1262 = vmatpush1.msra.mxu0 0.0
  %1263 = vmatprep.subr.mxu0 0.0
  %1264 = vmatpush1.msra.mxu0 0.0
  %1265 = vmatprep.subr.mxu0 0.0
  %1266 = vmatpush1.msra.mxu0 0.0
  %1267 = vmatprep.subr.mxu0 0.0
  %1268 = vmatpush1.msra.mxu0 0.0
  %1269 = vmatprep.subr.mxu0 0.0
  %1270 = vmatpush1.msra.mxu0 0.0
  %1271 = vmatprep.subr.mxu0 0.0
  %1272 = vmatpush1.msra.mxu0 0.0
  %1273 = vmatprep.subr.mxu0 0.0
  %1274 = vmatpush1.msra.mxu0 0.0
  %1275 = vmatprep.subr.mxu0 0.0
  %1276 = vmatpush1.msra.mxu0 0.0
  %1277 = vmatprep.subr.mxu0 0.0
  %1278 = vmatpush1.msra.mxu0 0.0
  %1279 = vmatprep.subr.mxu0 0.0
  %1280 = vmatpush1.msra.mxu0 0.0
  %1281 = vmatprep.subr.mxu0 0.0
  %1282 = vmatpush1.msra.mxu0 0.0
  %1283 = vmatprep.subr.mxu0 0.0
  %1284 = vmatpush1.msra.mxu0 0.0
  %1285 = vmatprep.mubr.f32.mxu0 0.0
  %1286 = vmatmul.mubr.f32.gmra.mrb[0].mxu0 %v1197
  %v1287 = vpop.f32.mrb[0].mxu0
  %v1288 = vadd.f32 %v1219, %v1287
  %v1289 = vpop.f32.mrb[0].mxu0
  %1290 = vdwg.mxu0
  %1291 = vst [vmem:[%s7] sm:$0xff] %v1288
  // Predicated region
  $region30: #{outgoing_noisy_mlp_forward.1} parent=0 // pred_check
    _
  $region31: #{outgoing_noisy_mlp_forward.1} parent=0 // pred_check_branch
    %1293 = sbr.rel (0) target = $region33
  $region32: #{outgoing_noisy_mlp_forward.1} parent=0 // pred_region
    _
  $region33: #{outgoing_noisy_mlp_forward.1} parent=0 // pred_fallthru
    _
  // Predicated region
  $region34: #{outgoing_noisy_mlp_forward.1} parent=0 // pred_check
    _
  $region35: #{outgoing_noisy_mlp_forward.1} parent=0 // pred_check_branch
    %1295 = sbr.rel (0) target = $region37
  $region36: #{outgoing_noisy_mlp_forward.1} parent=0 // pred_region
    _
  $region37: #{outgoing_noisy_mlp_forward.1} parent=0 // pred_fallthru
    _

</llo_original>
